<compile_context>
chip_gen: v7x
topology: tpu7x:2x2x1
jax: 0.10.0
libtpu: 0.0.40
codegen_flags: <defaults>
</compile_context>

<pallas_src>
import functools

import jax
import jax.numpy as jnp
from jax import lax
from jax.experimental import pallas as pl
from jax.experimental.pallas import tpu as pltpu


def _ctx_kernel(x_ref, wkv_ref, ctx_ref, m_sc, l_sc, acc_sc, *, heads, dim_head):
    """Online-softmax accumulation of per-head context = softmax_n(k) @ v^T."""
    hidden = heads * dim_head
    ni = pl.program_id(1)

    @pl.when(ni == 0)
    def _():
        m_sc[...] = jnp.full_like(m_sc, -jnp.inf)
        l_sc[...] = jnp.zeros_like(l_sc)
        acc_sc[...] = jnp.zeros_like(acc_sc)

    x = x_ref[...]                                                    # (c, tn) bf16
    # k/v 1x1-conv == matmul over channels; bf16 operands, f32 accumulate.
    kv = jnp.dot(wkv_ref[...], x, preferred_element_type=jnp.float32)  # (2*hidden, tn)
    k = kv[:hidden, :].reshape(heads, dim_head, -1)                   # (H, d, tn) f32
    v = kv[hidden:, :].astype(jnp.bfloat16).reshape(heads, dim_head, -1)

    # Online softmax over the spatial (lane) axis n, in float32.
    m_old = m_sc[...]                                                 # (H, d, 1)
    m_new = jnp.maximum(m_old, jnp.max(k, axis=-1, keepdims=True))
    alpha = jnp.exp(m_old - m_new)                                    # (H, d, 1)
    p = jnp.exp(k - m_new)                                            # (H, d, tn)
    l_sc[...] = alpha * l_sc[...] + jnp.sum(p, axis=-1, keepdims=True)
    m_sc[...] = m_new

    # context_tile[h, d, e] = sum_n p[h, d, n] * v[h, e, n]  (heads batched, MXU bf16)
    ctx_tile = lax.dot_general(
        p.astype(jnp.bfloat16), v,
        (((2,), (2,)), ((0,), (0,))),
        preferred_element_type=jnp.float32)                           # (H, d, d)
    acc_sc[...] = alpha * acc_sc[...] + ctx_tile

    @pl.when(ni == pl.num_programs(1) - 1)
    def _():
        inv_l = pl.reciprocal(l_sc[...], approx=True)                 # (H, d, 1)
        ctx_ref[...] = acc_sc[...] * inv_l


def _out_kernel(x_ref, wq_ref, ctx_ref, wout_ref, bout_ref, o_ref, *, heads, dim_head):
    """out = context^T q per head, then the to_out 1x1 conv (one K=hidden matmul)."""
    hidden = heads * dim_head
    x = x_ref[...]                                                    # (c, tn) bf16
    q = jnp.dot(wq_ref[...], x, preferred_element_type=jnp.float32)   # (hidden, tn)
    q_h = q.astype(jnp.bfloat16).reshape(heads, dim_head, -1)         # (H, d, tn)
    ctx = ctx_ref[...].astype(jnp.bfloat16)                           # (H, d, e)

    # out[h, e, n] = sum_d ctx[h, d, e] * q[h, d, n]
    out_h = lax.dot_general(
        ctx, q_h,
        (((1,), (1,)), ((0,), (0,))),
        preferred_element_type=jnp.float32)                           # (H, e, tn)
    out = out_h.reshape(hidden, -1).astype(jnp.bfloat16)              # (hidden, tn)

    y = jnp.dot(wout_ref[...], out, preferred_element_type=jnp.float32)  # (c, tn)
    y = y + bout_ref[...]                                             # bias (c, 1)
    o_ref[...] = y.astype(o_ref.dtype)


def _choose_tile_n(n, target):
    """Largest multiple of 128 (<= target) dividing n, else the full n."""
    if n <= target or n % 128 != 0:
        return n
    tn = max(128, (target // 128) * 128)
    while n % tn != 0:
        tn -= 128
    return tn


def linear_attention(x_nchw, w_qkv, w_out, b_out, *, heads, dim_head, block_n=512):
    b, c, h, w = x_nchw.shape
    n = h * w
    hidden = heads * dim_head
    assert w_qkv.shape == (3 * hidden, c)
    assert w_out.shape == (c, hidden)
    assert b_out.shape == (c,)

    tn = _choose_tile_n(n, block_n)
    nt = n // tn

    # No transposes: NCHW -> (b, c, n) is a pure reshape; bf16 halves x's HBM traffic.
    x_bcn = x_nchw.reshape(b, c, n).astype(jnp.bfloat16)
    w_q = w_qkv[:hidden].astype(jnp.bfloat16)        # (hidden, c)
    w_kv = w_qkv[hidden:].astype(jnp.bfloat16)       # (2*hidden, c)  [k then v]
    w_o = w_out.astype(jnp.bfloat16)                 # (c, hidden)
    b_o = b_out.reshape(c, 1).astype(jnp.float32)    # (c, 1)

    vmem_limit = 48 * 1024 * 1024  # explicit; safe headroom on v5e/v6e/v7x

    # Pass 1: per-head context via online softmax over n-tiles (reduction axis last).
    ctx = pl.pallas_call(
        functools.partial(_ctx_kernel, heads=heads, dim_head=dim_head),
        out_shape=jax.ShapeDtypeStruct((b, heads, dim_head, dim_head), jnp.float32),
        grid_spec=pltpu.PrefetchScalarGridSpec(
            num_scalar_prefetch=0,
            grid=(b, nt),
            in_specs=[
                pl.BlockSpec((None, c, tn), lambda bi, ni: (bi, 0, ni)),
                pl.BlockSpec((2 * hidden, c), lambda bi, ni: (0, 0)),
            ],
            out_specs=pl.BlockSpec((None, heads, dim_head, dim_head),
                                   lambda bi, ni: (bi, 0, 0, 0)),
            scratch_shapes=[
                pltpu.VMEM((heads, dim_head, 1), jnp.float32),   # running max m
                pltpu.VMEM((heads, dim_head, 1), jnp.float32),   # running sum l
                pltpu.VMEM((heads, dim_head, dim_head), jnp.float32),  # context acc
            ]),
        compiler_params=pltpu.CompilerParams(
            dimension_semantics=("parallel", "arbitrary"),
            vmem_limit_bytes=vmem_limit),
    )(x_bcn, w_kv)

    # Pass 2: q, context application and output projection, fully parallel over tiles.
    out_bcn = pl.pallas_call(
        functools.partial(_out_kernel, heads=heads, dim_head=dim_head),
        out_shape=jax.ShapeDtypeStruct((b, c, n), x_nchw.dtype),
        grid_spec=pltpu.PrefetchScalarGridSpec(
            num_scalar_prefetch=0,
            grid=(b, nt),
            in_specs=[
                pl.BlockSpec((None, c, tn), lambda bi, ni: (bi, 0, ni)),
                pl.BlockSpec((hidden, c), lambda bi, ni: (0, 0)),
                pl.BlockSpec((None, heads, dim_head, dim_head),
                             lambda bi, ni: (bi, 0, 0, 0)),
                pl.BlockSpec((c, hidden), lambda bi, ni: (0, 0)),
                pl.BlockSpec((c, 1), lambda bi, ni: (0, 0)),
            ],
            out_specs=pl.BlockSpec((None, c, tn), lambda bi, ni: (bi, 0, ni)),
        ),
        compiler_params=pltpu.CompilerParams(
            dimension_semantics=("parallel", "parallel"),
            vmem_limit_bytes=vmem_limit),
    )(x_bcn, w_q, ctx, w_o, b_o)

    # (b, c, n) -> NCHW is a pure reshape.
    return out_bcn.reshape(b, c, h, w)


def _reference(x_nchw, w_qkv, w_out, b_out, *, heads, dim_head):
    """Pure-JAX f32 reference mirroring the PyTorch forward."""
    b, c, h, w = x_nchw.shape
    n = h * w
    hidden = heads * dim_head
    xf = x_nchw.reshape(b, c, n)
    qkv = jnp.einsum('oc,bcn->bon', w_qkv, xf)                 # (b, 3*hidden, n)
    qkv = qkv.reshape(b, 3, heads, dim_head, n)
    q, k, v = qkv[:, 0], qkv[:, 1], qkv[:, 2]                  # (b, H, d, n)
    k = jax.nn.softmax(k, axis=-1)
    ctx = jnp.einsum('bhdn,bhen->bhde', k, v)
    out = jnp.einsum('bhde,bhdn->bhen', ctx, q)
    out = out.reshape(b, hidden, n)
    y = jnp.einsum('ok,bkn->bon', w_out, out) + b_out[None, :, None]
    return y.reshape(b, c, h, w)


if __name__ == "__main__":
    dim, heads, dim_head = 4, 4, 32
    hidden = heads * dim_head
    b, h, w = 2, 16, 16

    key = jax.random.PRNGKey(0)
    kx, kq, ko, kb = jax.random.split(key, 4)
    x = jax.random.normal(kx, (b, dim, h, w), dtype=jnp.float32)
    # Synthetic params in the PyTorch conv-weight layouts (squeezed 1x1 kernels).
    w_qkv = jax.random.normal(kq, (3 * hidden, dim), dtype=jnp.float32) * 0.1
    w_out = jax.random.normal(ko, (dim, hidden), dtype=jnp.float32) * 0.1
    b_out = jax.random.normal(kb, (dim,), dtype=jnp.float32) * 0.1

    # block_n=128 so n=256 exercises the multi-tile online-softmax path.
    y = linear_attention(x, w_qkv, w_out, b_out,
                         heads=heads, dim_head=dim_head, block_n=128)
    y = jax.block_until_ready(y)

    y_ref = _reference(x, w_qkv, w_out, b_out, heads=heads, dim_head=dim_head)
    assert y.shape == (b, dim, h, w)
    max_err = float(jnp.max(jnp.abs(y - y_ref)))
    # bf16 MXU operands (f32 accumulation) vs f32 reference -> relaxed tolerance.
    assert jnp.allclose(y, y_ref, atol=2e-2, rtol=2e-2), \
        f"mismatch vs reference (max abs err {max_err})"

    print("KERNEL_OK")
</pallas_src>

<mosaic_0001>
module attributes {stable_mosaic.version = 11 : i64} {
  func.func @_ctx_kernel(%arg0: i32, %arg1: i32, %arg2: memref<1x4x128xbf16, #tpu.memory_space<vmem>>, %arg3: memref<256x4xbf16, #tpu.memory_space<vmem>>, %arg4: memref<1x4x32x32xf32, #tpu.memory_space<vmem>>, %arg5: memref<4x32x1xf32, #tpu.memory_space<vmem>>, %arg6: memref<4x32x1xf32, #tpu.memory_space<vmem>>, %arg7: memref<4x32x32xf32, #tpu.memory_space<vmem>>) attributes {dimension_semantics = [#tpu.dimension_semantics<parallel>, #tpu.dimension_semantics<arbitrary>], iteration_bounds = array<i64: 2, 2>, scalar_prefetch = 0 : i64, scratch_operands = 3 : i64, tpu.core_type = #tpu.core_type<tc>, window_params = [{transform_indices = @transform_0, window_bounds = array<i64: 1, 4, 128>}, {pipeline_mode = #tpu.pipeline_mode<synchronous>, transform_indices = @transform_1, window_bounds = array<i64: 256, 4>}, {transform_indices = @transform_2, window_bounds = array<i64: 1, 4, 32, 32>}]} {
    %c0_i32 = arith.constant 0 : i32
    %0 = arith.cmpi eq, %arg1, %c0_i32 : i32
    %1 = arith.extui %0 : i1 to i32
    %c0_i32_0 = arith.constant 0 : i32
    %2 = arith.cmpi ne, %1, %c0_i32_0 : i32
    scf.if %2 {
      %cst_27 = arith.constant 0xFF800000 : f32
      %38 = vector.broadcast %cst_27 : f32 to vector<4x32x1xf32>
      %c0_28 = arith.constant 0 : index
      %c0_29 = arith.constant 0 : index
      %c0_30 = arith.constant 0 : index
      %39 = vector.load %arg5[%c0_28, %c0_29, %c0_30] : memref<4x32x1xf32, #tpu.memory_space<vmem>>, vector<4x32x1xf32>
      tpu.vector_store %arg5[%c0_28, %c0_29, %c0_30], %38 {strides = array<i32>} : memref<4x32x1xf32, #tpu.memory_space<vmem>>, vector<4x32x1xf32>,
      %cst_31 = arith.constant 0.000000e+00 : f32
      %40 = vector.broadcast %cst_31 : f32 to vector<4x32x1xf32>
      %c0_32 = arith.constant 0 : index
      %c0_33 = arith.constant 0 : index
      %c0_34 = arith.constant 0 : index
      %41 = vector.load %arg6[%c0_32, %c0_33, %c0_34] : memref<4x32x1xf32, #tpu.memory_space<vmem>>, vector<4x32x1xf32>
      tpu.vector_store %arg6[%c0_32, %c0_33, %c0_34], %40 {strides = array<i32>} : memref<4x32x1xf32, #tpu.memory_space<vmem>>, vector<4x32x1xf32>,
      %cst_35 = arith.constant 0.000000e+00 : f32
      %42 = vector.broadcast %cst_35 : f32 to vector<4x32x32xf32>
      %c0_36 = arith.constant 0 : index
      %c0_37 = arith.constant 0 : index
      %c0_38 = arith.constant 0 : index
      %43 = vector.load %arg7[%c0_36, %c0_37, %c0_38] : memref<4x32x32xf32, #tpu.memory_space<vmem>>, vector<4x32x32xf32>
      tpu.vector_store %arg7[%c0_36, %c0_37, %c0_38], %42 {strides = array<i32>} : memref<4x32x32xf32, #tpu.memory_space<vmem>>, vector<4x32x32xf32>,
    } else {
    }
    %c0 = arith.constant 0 : index
    %c0_1 = arith.constant 0 : index
    %c0_2 = arith.constant 0 : index
    %3 = vector.load %arg2[%c0, %c0_1, %c0_2] : memref<1x4x128xbf16, #tpu.memory_space<vmem>>, vector<1x4x128xbf16>
    %4 = vector.shape_cast %3 : vector<1x4x128xbf16> to vector<4x128xbf16>
    %c0_3 = arith.constant 0 : index
    %c0_4 = arith.constant 0 : index
    %5 = vector.load %arg3[%c0_3, %c0_4] : memref<256x4xbf16, #tpu.memory_space<vmem>>, vector<256x4xbf16>
    %cst = arith.constant dense<0.000000e+00> : vector<256x128xf32>
    %6 = tpu.matmul %5, %4, %cst {dimension_numbers = #tpu.dot_dimension_numbers<[1], [0], [0], [1], [0, 0, 1, 1], [], []>} : vector<256x4xbf16>, vector<4x128xbf16>, vector<256x128xf32> -> vector<256x128xf32>
    %7 = vector.extract_strided_slice %6 {offsets = [0, 0], sizes = [128, 128], strides = [1, 1]} : vector<256x128xf32> to vector<128x128xf32>
    %8 = vector.shape_cast %7 : vector<128x128xf32> to vector<4x32x128xf32>
    %9 = vector.extract_strided_slice %6 {offsets = [128, 0], sizes = [128, 128], strides = [1, 1]} : vector<256x128xf32> to vector<128x128xf32>
    %10 = arith.truncf %9 : vector<128x128xf32> to vector<128x128xbf16>
    %11 = vector.shape_cast %10 : vector<128x128xbf16> to vector<4x32x128xbf16>
    %c0_5 = arith.constant 0 : index
    %c0_6 = arith.constant 0 : index
    %c0_7 = arith.constant 0 : index
    %12 = vector.load %arg5[%c0_5, %c0_6, %c0_7] : memref<4x32x1xf32, #tpu.memory_space<vmem>>, vector<4x32x1xf32>
    %cst_8 = arith.constant dense<0xFF800000> : vector<4x32xf32>
    %13 = vector.multi_reduction <maximumf>, %8, %cst_8 [2] : vector<4x32x128xf32> to vector<4x32xf32>
    %14 = vector.shape_cast %13 : vector<4x32xf32> to vector<4x32x1xf32>
    %15 = arith.maximumf %12, %14 : vector<4x32x1xf32>
    %16 = arith.subf %12, %15 : vector<4x32x1xf32>
    %17 = math.exp %16 : vector<4x32x1xf32>
    %18 = vector.broadcast %15 : vector<4x32x1xf32> to vector<4x32x128xf32>
    %19 = arith.subf %8, %18 : vector<4x32x128xf32>
    %20 = math.exp %19 : vector<4x32x128xf32>
    %c0_9 = arith.constant 0 : index
    %c0_10 = arith.constant 0 : index
    %c0_11 = arith.constant 0 : index
    %21 = vector.load %arg6[%c0_9, %c0_10, %c0_11] : memref<4x32x1xf32, #tpu.memory_space<vmem>>, vector<4x32x1xf32>
    %22 = arith.mulf %17, %21 : vector<4x32x1xf32>
    %cst_12 = arith.constant dense<0.000000e+00> : vector<4x32xf32>
    %23 = vector.multi_reduction <add>, %20, %cst_12 [2] : vector<4x32x128xf32> to vector<4x32xf32>
    %24 = vector.shape_cast %23 : vector<4x32xf32> to vector<4x32x1xf32>
    %25 = arith.addf %22, %24 : vector<4x32x1xf32>
    %c0_13 = arith.constant 0 : index
    %c0_14 = arith.constant 0 : index
    %c0_15 = arith.constant 0 : index
    %26 = vector.load %arg6[%c0_13, %c0_14, %c0_15] : memref<4x32x1xf32, #tpu.memory_space<vmem>>, vector<4x32x1xf32>
    tpu.vector_store %arg6[%c0_13, %c0_14, %c0_15], %25 {strides = array<i32>} : memref<4x32x1xf32, #tpu.memory_space<vmem>>, vector<4x32x1xf32>,
    %c0_16 = arith.constant 0 : index
    %c0_17 = arith.constant 0 : index
    %c0_18 = arith.constant 0 : index
    %27 = vector.load %arg5[%c0_16, %c0_17, %c0_18] : memref<4x32x1xf32, #tpu.memory_space<vmem>>, vector<4x32x1xf32>
    tpu.vector_store %arg5[%c0_16, %c0_17, %c0_18], %15 {strides = array<i32>} : memref<4x32x1xf32, #tpu.memory_space<vmem>>, vector<4x32x1xf32>,
    %28 = arith.truncf %20 : vector<4x32x128xf32> to vector<4x32x128xbf16>
    %cst_19 = arith.constant dense<0.000000e+00> : vector<4x32x32xf32>
    %29 = tpu.matmul %28, %11, %cst_19 {dimension_numbers = #tpu.dot_dimension_numbers<[2], [2], [1], [1], [0, 0, 0, 1, 1, 1], [0], [0]>} : vector<4x32x128xbf16>, vector<4x32x128xbf16>, vector<4x32x32xf32> -> vector<4x32x32xf32>
    %c0_20 = arith.constant 0 : index
    %c0_21 = arith.constant 0 : index
    %c0_22 = arith.constant 0 : index
    %30 = vector.load %arg7[%c0_20, %c0_21, %c0_22] : memref<4x32x32xf32, #tpu.memory_space<vmem>>, vector<4x32x32xf32>
    %31 = vector.broadcast %17 : vector<4x32x1xf32> to vector<4x32x32xf32>
    %32 = arith.mulf %31, %30 : vector<4x32x32xf32>
    %33 = arith.addf %32, %29 : vector<4x32x32xf32>
    %c0_23 = arith.constant 0 : index
    %c0_24 = arith.constant 0 : index
    %c0_25 = arith.constant 0 : index
    %34 = vector.load %arg7[%c0_23, %c0_24, %c0_25] : memref<4x32x32xf32, #tpu.memory_space<vmem>>, vector<4x32x32xf32>
    tpu.vector_store %arg7[%c0_23, %c0_24, %c0_25], %33 {strides = array<i32>} : memref<4x32x32xf32, #tpu.memory_space<vmem>>, vector<4x32x32xf32>,
    %c1_i32 = arith.constant 1 : i32
    %35 = arith.cmpi eq, %arg1, %c1_i32 : i32
    %36 = arith.extui %35 : i1 to i32
    %c0_i32_26 = arith.constant 0 : i32
    %37 = arith.cmpi ne, %36, %c0_i32_26 : i32
    scf.if %37 {
      %c0_27 = arith.constant 0 : index
      %c0_28 = arith.constant 0 : index
      %c0_29 = arith.constant 0 : index
      %38 = vector.load %arg6[%c0_27, %c0_28, %c0_29] : memref<4x32x1xf32, #tpu.memory_space<vmem>>, vector<4x32x1xf32>
      %39 = tpu.reciprocal %38 {approx = true} : vector<4x32x1xf32> -> vector<4x32x1xf32>
      %c0_30 = arith.constant 0 : index
      %c0_31 = arith.constant 0 : index
      %c0_32 = arith.constant 0 : index
      %40 = vector.load %arg7[%c0_30, %c0_31, %c0_32] : memref<4x32x32xf32, #tpu.memory_space<vmem>>, vector<4x32x32xf32>
      %41 = vector.broadcast %39 : vector<4x32x1xf32> to vector<4x32x32xf32>
      %42 = arith.mulf %40, %41 : vector<4x32x32xf32>
      %c0_33 = arith.constant 0 : index
      %c0_34 = arith.constant 0 : index
      %c0_35 = arith.constant 0 : index
      %c0_36 = arith.constant 0 : index
      %43 = vector.load %arg4[%c0_33, %c0_34, %c0_35, %c0_36] : memref<1x4x32x32xf32, #tpu.memory_space<vmem>>, vector<1x4x32x32xf32>
      %44 = vector.shape_cast %43 : vector<1x4x32x32xf32> to vector<4x32x32xf32>
      %45 = vector.shape_cast %42 : vector<4x32x32xf32> to vector<1x4x32x32xf32>
      tpu.vector_store %arg4[%c0_33, %c0_34, %c0_35, %c0_36], %45 {strides = array<i32>} : memref<1x4x32x32xf32, #tpu.memory_space<vmem>>, vector<1x4x32x32xf32>,
    } else {
    }
    return
  }
  func.func @transform_0(%arg0: i32, %arg1: i32) -> (i32, i32, i32) {
    %c0_i32 = arith.constant 0 : i32
    %c0_i32_0 = arith.constant 0 : i32
    return %arg0, %c0_i32, %arg1 : i32, i32, i32
  }
  func.func @transform_1(%arg0: i32, %arg1: i32) -> (i32, i32) {
    %c0_i32 = arith.constant 0 : i32
    %c0_i32_0 = arith.constant 0 : i32
    %c0_i32_1 = arith.constant 0 : i32
    return %c0_i32, %c0_i32_0 : i32, i32
  }
  func.func @transform_2(%arg0: i32, %arg1: i32) -> (i32, i32, i32, i32) {
    %c0_i32 = arith.constant 0 : i32
    %c0_i32_0 = arith.constant 0 : i32
    %c0_i32_1 = arith.constant 0 : i32
    %c0_i32_2 = arith.constant 0 : i32
    return %arg0, %c0_i32, %c0_i32_0, %c0_i32_1 : i32, i32, i32, i32
  }
}

</mosaic_0001>

<llo_original>
// kernel: tpu_custom_call.1
$region0: #{tpu_custom_call.1}
  #allocation0 [shape = 'u32[]', space=smem, size = 0x4, offset = 0x4, fixed_abs, tag = 'smem constant byte address 0x4 - core index']
  #allocation1 [shape = 'u32[144,128]{1,0:T(1,128)}', space=vmem, size = 0x12000, scoped, tag = 'internal scratch']
  #allocation2 [shape = 'f32[4,32,1]{2,1,0:T(8,128)}', space=vmem, size = 0x10000, scoped, tag = 'scratch operand']
  #allocation3 [shape = 'f32[4,32,1]{2,1,0:T(8,128)}', space=vmem, size = 0x10000, scoped, tag = 'scratch operand']
  #allocation4 [shape = 'f32[4,32,32]{2,1,0:T(8,128)}', space=vmem, size = 0x10000, scoped, tag = 'scratch operand']
  %s0 = inlined_call_operand.vmem [shape: bf16[2,4,256], index: 0, kind: input, shape index: {}]
  %s1 = inlined_call_operand.vmem [shape: bf16[256,4], index: 1, kind: input, shape index: {}]
  %s2 = inlined_call_operand.hbm [shape: f32[2,4,32,32], index: 2, kind: output, shape index: {}]
  %s3 = sld [smem:[#allocation0]]
  $region49: #{tpu_custom_call.1} parent=0
    _
  %s5 = ssub.s32 1, %s3
  %s6 = scalar_select 0, %s5, %s3
  $region1: #{tpu_custom_call.1} parent=0
    #allocation5 [shape = 'u8[131072]{0}', space=vmem, size = 0x20000, scoped, tag = 'output window, operand 0']
    #allocation6 [shape = 's32[2]{0}', space=sflag, size = 0x8, scoped, tag = 'scoped memory for tpu_custom_call.1']
    %7 = vsyncpa [#allocation6], 0
    %s8 = scalar_lea.sflag [#allocation6], 1
    %9 = vsyncpa %s8, 0
    loop: start=0, step=1, limit=6
    $region2: #{tpu_custom_call.1} parent=1 // loop_pre_header
      _
    $region3: #{tpu_custom_call.1} parent=1 // loop_header
      %s11 = sphi 0, %s15
      %p12 = scmp.ge.s32.totalorder %s11, 6
      %s18 = sphi 0, %s30
      %s19 = sphi 0, %s26
      %s20 = sphi 0, %s18
      %s21 = sphi 0, %s19
      %s22 = sphi 0, %s20
      %s23 = sphi 0, %s21
      %s35 = sphi 0, %s37
      %s38 = sphi 0, %s35
      %s39 = sphi 0, %s38
      %s55 = sphi 0, %s39
      %s59 = sphi 0, %s59
      %s61 = sphi 0, %s59
      %s62 = sphi 0, %s61
      %s76 = sphi 0, %s62
      %s82 = sphi 0, %s84
      %s85 = sphi 0, %s82
      %s86 = sphi 0, %s85
      %s102 = sphi 0, %s86
    $region4: #{tpu_custom_call.1} parent=1 // loop_header_branch
      %14 = sbr.rel (%p12) target = $region8
    $region5: #{tpu_custom_call.1} parent=1 // loop_body
      %s16 = ssub.s32 %s11, 1
      %s17 = ssub.s32 %s11, 2
      %s24 = sadd.s32 1, %s19
      %p25 = scmp.ge.s32.totalorder %s24, 2
      %s26 = scalar_select %p25, 0, %s24
      %s27 = sadd.s32 1, %s18
      %s28 = scalar_select %p25, %s27, %s18
      %p29 = scmp.ge.s32.totalorder %s28, 2
      %s30 = scalar_select %p29, 0, %s28
      %s31 = ssub.s32 %s18, %s30
      %s32 = ssub.s32 %s19, %s26
      %s33 = sor.u32 %s31, %s32
      %p34 = scmp.eq.s32.totalorder %s33, 0
      %s36 = sadd.s32 %s35, 1
      %s37 = scalar_select %p34, %s35, %s36
      %p40 = pneg %p34
      %p41 = scmp.eq.s32.totalorder %s11, 3
      %p42 = por %p40, %p41
      %p43 = scmp.ne.s32.totalorder %s35, %s38
      %p44 = scmp.eq.s32.totalorder %s11, 0
      %p45 = por %p43, %p44
      %p46 = scmp.ne.s32.totalorder %s35, %s38
      %p47 = scmp.eq.s32.totalorder %s16, 3
      %p48 = por %p46, %p47
      %p49 = scmp.ne.s32.totalorder %s38, %s39
      %p50 = scmp.eq.s32.totalorder %s16, 0
      %p51 = por %p49, %p50
      %p52 = scmp.ne.s32.totalorder %s38, %s39
      %p53 = scmp.eq.s32.totalorder %s17, 3
      %p54 = por %p52, %p53
      %p56 = scmp.ne.s32.totalorder %s39, %s55
      %p57 = scmp.eq.s32.totalorder %s17, 0
      %p58 = por %p56, %p57
      %s60 = sadd.s32 %s59, 1
      %p63 = scmp.eq.s32.totalorder %s11, 3
      %p64 = scmp.ne.s32.totalorder %s59, %s61
      %p65 = scmp.eq.s32.totalorder %s11, 0
      %p66 = por %p64, %p65
      %p67 = scmp.ne.s32.totalorder %s59, %s61
      %p68 = scmp.eq.s32.totalorder %s16, 3
      %p69 = por %p67, %p68
      %p70 = scmp.ne.s32.totalorder %s61, %s62
      %p71 = scmp.eq.s32.totalorder %s16, 0
      %p72 = por %p70, %p71
      %p73 = scmp.ne.s32.totalorder %s61, %s62
      %p74 = scmp.eq.s32.totalorder %s17, 3
      %p75 = por %p73, %p74
      %p77 = scmp.ne.s32.totalorder %s62, %s76
      %p78 = scmp.eq.s32.totalorder %s17, 0
      %p79 = por %p77, %p78
      %s80 = ssub.s32 %s18, %s30
      %p81 = scmp.eq.s32.totalorder %s80, 0
      %s83 = sadd.s32 %s82, 1
      %s84 = scalar_select %p81, %s82, %s83
      %p87 = pneg %p81
      %p88 = scmp.eq.s32.totalorder %s11, 3
      %p89 = por %p87, %p88
      %p90 = scmp.ne.s32.totalorder %s82, %s85
      %p91 = scmp.eq.s32.totalorder %s11, 0
      %p92 = por %p90, %p91
      %p93 = scmp.ne.s32.totalorder %s82, %s85
      %p94 = scmp.eq.s32.totalorder %s16, 3
      %p95 = por %p93, %p94
      %p96 = scmp.ne.s32.totalorder %s85, %s86
      %p97 = scmp.eq.s32.totalorder %s16, 0
      %p98 = por %p96, %p97
      %p99 = scmp.ne.s32.totalorder %s85, %s86
      %p100 = scmp.eq.s32.totalorder %s17, 3
      %p101 = por %p99, %p100
      %p103 = scmp.ne.s32.totalorder %s86, %s102
      %p104 = scmp.eq.s32.totalorder %s17, 0
      %p105 = por %p103, %p104
      %p106 = scmp.le.s32.totalorder 1, %s11
      %p107 = scmp.lt.s32.totalorder %s11, 5
      %p108 = pnand %p106, %p107
      %p109 = pneg %p108
      // Predicated region
      $region9: #{tpu_custom_call.1} parent=5 // pred_check
        _
      $region10: #{tpu_custom_call.1} parent=5 // pred_check_branch
        %111 = sbr.rel (%p108) target = $region12
      $region11: #{tpu_custom_call.1} parent=5 // pred_region
        %s112 = ssub.s32 %s11, 1
        // Predicated region
        $region13: #{tpu_custom_call.1} parent=11 // pred_check
          %p113 = pneg %p72
        $region14: #{tpu_custom_call.1} parent=11 // pred_check_branch
          %115 = sbr.rel (%p113) target = $region16
        $region15: #{tpu_custom_call.1} parent=11 // pred_region
          _
        $region16: #{tpu_custom_call.1} parent=11 // pred_fallthru
          _
      $region12: #{tpu_custom_call.1} parent=5 // pred_fallthru
        _
      %p116 = scmp.lt.s32.totalorder %s11, 4
      // Predicated region
      $region17: #{tpu_custom_call.1} parent=5 // pred_check
        %p117 = pneg %p116
      $region18: #{tpu_custom_call.1} parent=5 // pred_check_branch
        %119 = sbr.rel (%p117) target = $region20
      $region19: #{tpu_custom_call.1} parent=5 // pred_region
        // Predicated region
        $region21: #{tpu_custom_call.1} parent=19 // pred_check
          %p120 = pneg %p45
        $region22: #{tpu_custom_call.1} parent=19 // pred_check_branch
          %122 = sbr.rel (%p120) target = $region24
        $region23: #{tpu_custom_call.1} parent=19 // pred_region
          %p123 = scmp.lt.s32.totalorder %s18, 1
          %s124 = scalar_select %p123, %s18, 1
          %p125 = scmp.lt.s32.totalorder %s19, 1
          %s126 = scalar_select %p125, %s19, 1
          %s127 = smul.addr %s124, 2
          %s128 = sadd.s32 %s126, %s127
          %s129 = smul.addr %s128, 2
          %s130 = scalar_lea.vmem %s0, %s129
        $region24: #{tpu_custom_call.1} parent=19 // pred_fallthru
          _
      $region20: #{tpu_custom_call.1} parent=5 // pred_fallthru
        _
      %p131 = scmp.le.s32.totalorder 1, %s11
      %p132 = scmp.lt.s32.totalorder %s11, 5
      %p133 = pnand %p131, %p132
      %p134 = pneg %p133
      // Predicated region
      $region25: #{tpu_custom_call.1} parent=5 // pred_check
        _
      $region26: #{tpu_custom_call.1} parent=5 // pred_check_branch
        %136 = sbr.rel (%p133) target = $region28
      $region27: #{tpu_custom_call.1} parent=5 // pred_region
        %s137 = ssub.s32 %s11, 1
        %p138 = scmp.lt.s32.totalorder %s20, 1
        %s139 = scalar_select %p138, %s20, 1
        %p140 = scmp.lt.s32.totalorder %s21, 1
        %s141 = scalar_select %p140, %s21, 1
        %s142 = smul.addr %s139, 2
        %s143 = sadd.s32 %s141, %s142
        %s144 = smul.addr %s143, 2
        %s145 = scalar_lea.vmem %s0, %s144
        %p146 = pneg %p51
        %p147 = pneg %p48
        %p148 = pneg %p72
        %p149 = pneg %p69
        %p150 = pneg %p98
        %p151 = pneg %p95
        %s152 = sand.u32 %s85, 1
        %s153 = scalar_lea.sflag [#allocation6], %s152
        %s154 = sand.u32 %s85, 1
        %s155 = smul.addr %s154, 128
        %s156 = scalar_lea.vmem [#allocation5], %s155
        %p157 = scmp.lt.s32.totalorder %s20, 1
        %s158 = scalar_select %p157, %s20, 1
        %p159 = scmp.lt.s32.totalorder %s21, 1
        %s160 = scalar_select %p159, %s21, 1
        %s161 = smul.addr %s158, 2
        %s162 = sadd.s32 %s160, %s161
        %s163 = smul.addr %s162, 2
        %s164 = scalar_lea.vmem %s0, %s163
        %p166 = scmp.eq.s32.totalorder %s21, 0
        // Predicated region
        $region29: #{tpu_custom_call.1} parent=27 // pred_check
          %p167 = pneg %p166
        $region30: #{tpu_custom_call.1} parent=27 // pred_check_branch
          %169 = sbr.rel (%p167) target = $region32
        $region31: #{tpu_custom_call.1} parent=27 // pred_region
          %vm170 = vcmask 7168
          %171 = vst.msk [vmem:[#allocation2] sm:$0xff] %vm170, -inf
          %172 = vst.msk [vmem:[#allocation2 + $0x8] sm:$0xff] %vm170, -inf
          %173 = vst.msk [vmem:[#allocation2 + $0x10] sm:$0xff] %vm170, -inf
          %174 = vst.msk [vmem:[#allocation2 + $0x18] sm:$0xff] %vm170, -inf
          %175 = vst.msk [vmem:[#allocation2 + $0x20] sm:$0xff] %vm170, -inf
          %176 = vst.msk [vmem:[#allocation2 + $0x28] sm:$0xff] %vm170, -inf
          %177 = vst.msk [vmem:[#allocation2 + $0x30] sm:$0xff] %vm170, -inf
          %178 = vst.msk [vmem:[#allocation2 + $0x38] sm:$0xff] %vm170, -inf
          %179 = vst.msk [vmem:[#allocation2 + $0x40] sm:$0xff] %vm170, -inf
          %180 = vst.msk [vmem:[#allocation2 + $0x48] sm:$0xff] %vm170, -inf
          %181 = vst.msk [vmem:[#allocation2 + $0x50] sm:$0xff] %vm170, -inf
          %182 = vst.msk [vmem:[#allocation2 + $0x58] sm:$0xff] %vm170, -inf
          %183 = vst.msk [vmem:[#allocation2 + $0x60] sm:$0xff] %vm170, -inf
          %184 = vst.msk [vmem:[#allocation2 + $0x68] sm:$0xff] %vm170, -inf
          %185 = vst.msk [vmem:[#allocation2 + $0x70] sm:$0xff] %vm170, -inf
          %186 = vst.msk [vmem:[#allocation2 + $0x78] sm:$0xff] %vm170, -inf
          %187 = vst.msk [vmem:[#allocation3] sm:$0xff] %vm170, 0.0
          %188 = vst.msk [vmem:[#allocation3 + $0x8] sm:$0xff] %vm170, 0.0
          %189 = vst.msk [vmem:[#allocation3 + $0x10] sm:$0xff] %vm170, 0.0
          %190 = vst.msk [vmem:[#allocation3 + $0x18] sm:$0xff] %vm170, 0.0
          %191 = vst.msk [vmem:[#allocation3 + $0x20] sm:$0xff] %vm170, 0.0
          %192 = vst.msk [vmem:[#allocation3 + $0x28] sm:$0xff] %vm170, 0.0
          %193 = vst.msk [vmem:[#allocation3 + $0x30] sm:$0xff] %vm170, 0.0
          %194 = vst.msk [vmem:[#allocation3 + $0x38] sm:$0xff] %vm170, 0.0
          %195 = vst.msk [vmem:[#allocation3 + $0x40] sm:$0xff] %vm170, 0.0
          %196 = vst.msk [vmem:[#allocation3 + $0x48] sm:$0xff] %vm170, 0.0
          %197 = vst.msk [vmem:[#allocation3 + $0x50] sm:$0xff] %vm170, 0.0
          %198 = vst.msk [vmem:[#allocation3 + $0x58] sm:$0xff] %vm170, 0.0
          %199 = vst.msk [vmem:[#allocation3 + $0x60] sm:$0xff] %vm170, 0.0
          %200 = vst.msk [vmem:[#allocation3 + $0x68] sm:$0xff] %vm170, 0.0
          %201 = vst.msk [vmem:[#allocation3 + $0x70] sm:$0xff] %vm170, 0.0
          %202 = vst.msk [vmem:[#allocation3 + $0x78] sm:$0xff] %vm170, 0.0
          %vm203 = vcmask 261120
          %204 = vst.msk [vmem:[#allocation4] sm:$0xff] %vm203, 0.0
          %205 = vst.msk [vmem:[#allocation4 + $0x8] sm:$0xff] %vm203, 0.0
          %206 = vst.msk [vmem:[#allocation4 + $0x10] sm:$0xff] %vm203, 0.0
          %207 = vst.msk [vmem:[#allocation4 + $0x18] sm:$0xff] %vm203, 0.0
          %208 = vst.msk [vmem:[#allocation4 + $0x20] sm:$0xff] %vm203, 0.0
          %209 = vst.msk [vmem:[#allocation4 + $0x28] sm:$0xff] %vm203, 0.0
          %210 = vst.msk [vmem:[#allocation4 + $0x30] sm:$0xff] %vm203, 0.0
          %211 = vst.msk [vmem:[#allocation4 + $0x38] sm:$0xff] %vm203, 0.0
          %212 = vst.msk [vmem:[#allocation4 + $0x40] sm:$0xff] %vm203, 0.0
          %213 = vst.msk [vmem:[#allocation4 + $0x48] sm:$0xff] %vm203, 0.0
          %214 = vst.msk [vmem:[#allocation4 + $0x50] sm:$0xff] %vm203, 0.0
          %215 = vst.msk [vmem:[#allocation4 + $0x58] sm:$0xff] %vm203, 0.0
          %216 = vst.msk [vmem:[#allocation4 + $0x60] sm:$0xff] %vm203, 0.0
          %217 = vst.msk [vmem:[#allocation4 + $0x68] sm:$0xff] %vm203, 0.0
          %218 = vst.msk [vmem:[#allocation4 + $0x70] sm:$0xff] %vm203, 0.0
          %219 = vst.msk [vmem:[#allocation4 + $0x78] sm:$0xff] %vm203, 0.0
        $region32: #{tpu_custom_call.1} parent=27 // pred_fallthru
          _
        %v220 = vld [vmem:[%s164] sm:$0x3]
        %v221 = vld [vmem:[%s1] sm:$0xf]
        %v222 = vld [vmem:[%s1 + $0x4] sm:$0xf]
        %v223 = vld [vmem:[%s1 + $0x8] sm:$0xf]
        %v224 = vld [vmem:[%s1 + $0xc] sm:$0xf]
        %v225 = vld [vmem:[%s1 + $0x10] sm:$0xf]
        %v226 = vld [vmem:[%s1 + $0x14] sm:$0xf]
        %v227 = vld [vmem:[%s1 + $0x18] sm:$0xf]
        %v228 = vld [vmem:[%s1 + $0x1c] sm:$0xf]
        %v229 = vld [vmem:[%s1 + $0x20] sm:$0xf]
        %v230 = vld [vmem:[%s1 + $0x24] sm:$0xf]
        %v231 = vld [vmem:[%s1 + $0x28] sm:$0xf]
        %v232 = vld [vmem:[%s1 + $0x2c] sm:$0xf]
        %v233 = vld [vmem:[%s1 + $0x30] sm:$0xf]
        %v234 = vld [vmem:[%s1 + $0x34] sm:$0xf]
        %v235 = vld [vmem:[%s1 + $0x38] sm:$0xf]
        %v236 = vld [vmem:[%s1 + $0x3c] sm:$0xf]
        %v237 = vld [vmem:[%s1 + $0x40] sm:$0xf]
        %v238 = vld [vmem:[%s1 + $0x44] sm:$0xf]
        %v239 = vld [vmem:[%s1 + $0x48] sm:$0xf]
        %v240 = vld [vmem:[%s1 + $0x4c] sm:$0xf]
        %v241 = vld [vmem:[%s1 + $0x50] sm:$0xf]
        %v242 = vld [vmem:[%s1 + $0x54] sm:$0xf]
        %v243 = vld [vmem:[%s1 + $0x58] sm:$0xf]
        %v244 = vld [vmem:[%s1 + $0x5c] sm:$0xf]
        %v245 = vld [vmem:[%s1 + $0x60] sm:$0xf]
        %v246 = vld [vmem:[%s1 + $0x64] sm:$0xf]
        %v247 = vld [vmem:[%s1 + $0x68] sm:$0xf]
        %v248 = vld [vmem:[%s1 + $0x6c] sm:$0xf]
        %v249 = vld [vmem:[%s1 + $0x70] sm:$0xf]
        %v250 = vld [vmem:[%s1 + $0x74] sm:$0xf]
        %v251 = vld [vmem:[%s1 + $0x78] sm:$0xf]
        %v252 = vld [vmem:[%s1 + $0x7c] sm:$0xf]
        %v285 = vunpack.c.l.b16 %v221
        %v286 = vunpack.c.l.b16 %v222
        %v287 = vunpack.c.l.b16 %v223
        %v288 = vunpack.c.l.b16 %v224
        %v289 = vunpack.c.l.b16 %v225
        %v290 = vunpack.c.l.b16 %v226
        %v291 = vunpack.c.l.b16 %v227
        %v292 = vunpack.c.l.b16 %v228
        %v293 = vunpack.c.l.b16 %v229
        %v294 = vunpack.c.l.b16 %v230
        %v295 = vunpack.c.l.b16 %v231
        %v296 = vunpack.c.l.b16 %v232
        %v297 = vunpack.c.l.b16 %v233
        %v298 = vunpack.c.l.b16 %v234
        %v299 = vunpack.c.l.b16 %v235
        %v300 = vunpack.c.l.b16 %v236
        %v301 = vunpack.c.l.b16 %v237
        %v302 = vunpack.c.l.b16 %v238
        %v303 = vunpack.c.l.b16 %v239
        %v304 = vunpack.c.l.b16 %v240
        %v305 = vunpack.c.l.b16 %v241
        %v306 = vunpack.c.l.b16 %v242
        %v307 = vunpack.c.l.b16 %v243
        %v308 = vunpack.c.l.b16 %v244
        %v309 = vunpack.c.l.b16 %v245
        %v310 = vunpack.c.l.b16 %v246
        %v311 = vunpack.c.l.b16 %v247
        %v312 = vunpack.c.l.b16 %v248
        %v313 = vunpack.c.l.b16 %v249
        %v314 = vunpack.c.l.b16 %v250
        %v315 = vunpack.c.l.b16 %v251
        %v316 = vunpack.c.l.b16 %v252
        %v317 = vpack.c.b16 %v286, %v285
        %v318 = vpack.c.b16 %v288, %v287
        %v319 = vpack.c.b16 %v290, %v289
        %v320 = vpack.c.b16 %v292, %v291
        %v321 = vpack.c.b16 %v294, %v293
        %v322 = vpack.c.b16 %v296, %v295
        %v323 = vpack.c.b16 %v298, %v297
        %v324 = vpack.c.b16 %v300, %v299
        %v325 = vpack.c.b16 %v302, %v301
        %v326 = vpack.c.b16 %v304, %v303
        %v327 = vpack.c.b16 %v306, %v305
        %v328 = vpack.c.b16 %v308, %v307
        %v329 = vpack.c.b16 %v310, %v309
        %v330 = vpack.c.b16 %v312, %v311
        %v331 = vpack.c.b16 %v314, %v313
        %v332 = vpack.c.b16 %v316, %v315
        %vm333 = vcmask 31744
        %v335 = vsel %vm333, %v317, 0
        %v338 = vsel %vm333, %v318, 0
        %v341 = vsel %vm333, %v319, 0
        %v344 = vsel %vm333, %v320, 0
        %v347 = vsel %vm333, %v321, 0
        %v350 = vsel %vm333, %v322, 0
        %v353 = vsel %vm333, %v323, 0
        %v356 = vsel %vm333, %v324, 0
        %v359 = vsel %vm333, %v325, 0
        %v362 = vsel %vm333, %v326, 0
        %v365 = vsel %vm333, %v327, 0
        %v368 = vsel %vm333, %v328, 0
        %v371 = vsel %vm333, %v329, 0
        %v374 = vsel %vm333, %v330, 0
        %v377 = vsel %vm333, %v331, 0
        %v380 = vsel %vm333, %v332, 0
        %vm382 = vcmask 1041408
        %v384 = vsel %vm382, %v220, 0
        %386 = vmatprep.subr.bf16.mxu0 0
        %387 = vmatpush1.bf16.msra.mxu0 %v384
        %388 = vmatprep.subr.bf16.mxu0 0
        %389 = vmatpush1.bf16.msra.mxu0 0
        %390 = vmatprep.subr.bf16.mxu0 0
        %391 = vmatpush1.bf16.msra.mxu0 0
        %392 = vmatprep.subr.bf16.mxu0 0
        %393 = vmatpush1.bf16.msra.mxu0 0
        %394 = vmatprep.subr.bf16.mxu0 0
        %395 = vmatpush1.bf16.msra.mxu0 0
        %396 = vmatprep.subr.bf16.mxu0 0
        %397 = vmatpush1.bf16.msra.mxu0 0
        %398 = vmatprep.subr.bf16.mxu0 0
        %399 = vmatpush1.bf16.msra.mxu0 0
        %400 = vmatprep.subr.bf16.mxu0 0
        %401 = vmatpush1.bf16.msra.mxu0 0
        %402 = vmatprep.subr.bf16.mxu0 0
        %403 = vmatpush1.bf16.msra.mxu0 0
        %404 = vmatprep.subr.bf16.mxu0 0
        %405 = vmatpush1.bf16.msra.mxu0 0
        %406 = vmatprep.subr.bf16.mxu0 0
        %407 = vmatpush1.bf16.msra.mxu0 0
        %408 = vmatprep.subr.bf16.mxu0 0
        %409 = vmatpush1.bf16.msra.mxu0 0
        %410 = vmatprep.subr.bf16.mxu0 0
        %411 = vmatpush1.bf16.msra.mxu0 0
        %412 = vmatprep.subr.bf16.mxu0 0
        %413 = vmatpush1.bf16.msra.mxu0 0
        %414 = vmatprep.subr.bf16.mxu0 0
        %415 = vmatpush1.bf16.msra.mxu0 0
        %416 = vmatprep.subr.bf16.mxu0 0
        %417 = vmatpush1.bf16.msra.mxu0 0
        %418 = vmatprep.mubr.bf16.mxu0 0
        %419 = vmatmul.mubr.bf16.gmra.mrb[0].mxu0 %v335
        %v420 = vpop.f32.mrb[0].mxu0
        %v421 = vadd.f32 0.0, %v420
        %v422 = vpop.f32.mrb[0].mxu0
        %v423 = vpop.f32.mrb[0].mxu0
        %v424 = vadd.f32 0.0, %v423
        %v425 = vpop.f32.mrb[0].mxu0
        %426 = vmatprep.mubr.bf16.mxu0 0
        %427 = vmatmul.mubr.bf16.gmra.mrb[0].mxu0 %v338
        %v428 = vpop.f32.mrb[0].mxu0
        %v429 = vadd.f32 0.0, %v428
        %v430 = vpop.f32.mrb[0].mxu0
        %v431 = vpop.f32.mrb[0].mxu0
        %v432 = vadd.f32 0.0, %v431
        %v433 = vpop.f32.mrb[0].mxu0
        %434 = vmatprep.mubr.bf16.mxu0 0
        %435 = vmatmul.mubr.bf16.gmra.mrb[0].mxu0 %v341
        %v436 = vpop.f32.mrb[0].mxu0
        %v437 = vadd.f32 0.0, %v436
        %v438 = vpop.f32.mrb[0].mxu0
        %v439 = vpop.f32.mrb[0].mxu0
        %v440 = vadd.f32 0.0, %v439
        %v441 = vpop.f32.mrb[0].mxu0
        %442 = vmatprep.mubr.bf16.mxu0 0
        %443 = vmatmul.mubr.bf16.gmra.mrb[0].mxu0 %v344
        %v444 = vpop.f32.mrb[0].mxu0
        %v445 = vadd.f32 0.0, %v444
        %v446 = vpop.f32.mrb[0].mxu0
        %v447 = vpop.f32.mrb[0].mxu0
        %v448 = vadd.f32 0.0, %v447
        %v449 = vpop.f32.mrb[0].mxu0
        %450 = vmatprep.mubr.bf16.mxu0 0
        %451 = vmatmul.mubr.bf16.gmra.mrb[0].mxu0 %v347
        %v452 = vpop.f32.mrb[0].mxu0
        %v453 = vadd.f32 0.0, %v452
        %v454 = vpop.f32.mrb[0].mxu0
        %v455 = vpop.f32.mrb[0].mxu0
        %v456 = vadd.f32 0.0, %v455
        %v457 = vpop.f32.mrb[0].mxu0
        %458 = vmatprep.mubr.bf16.mxu0 0
        %459 = vmatmul.mubr.bf16.gmra.mrb[0].mxu0 %v350
        %v460 = vpop.f32.mrb[0].mxu0
        %v461 = vadd.f32 0.0, %v460
        %v462 = vpop.f32.mrb[0].mxu0
        %v463 = vpop.f32.mrb[0].mxu0
        %v464 = vadd.f32 0.0, %v463
        %v465 = vpop.f32.mrb[0].mxu0
        %466 = vmatprep.mubr.bf16.mxu0 0
        %467 = vmatmul.mubr.bf16.gmra.mrb[0].mxu0 %v353
        %v468 = vpop.f32.mrb[0].mxu0
        %v469 = vadd.f32 0.0, %v468
        %v470 = vpop.f32.mrb[0].mxu0
        %v471 = vpop.f32.mrb[0].mxu0
        %v472 = vadd.f32 0.0, %v471
        %v473 = vpop.f32.mrb[0].mxu0
        %474 = vmatprep.mubr.bf16.mxu0 0
        %475 = vmatmul.mubr.bf16.gmra.mrb[0].mxu0 %v356
        %v476 = vpop.f32.mrb[0].mxu0
        %v477 = vadd.f32 0.0, %v476
        %v478 = vpop.f32.mrb[0].mxu0
        %v479 = vpop.f32.mrb[0].mxu0
        %v480 = vadd.f32 0.0, %v479
        %v481 = vpop.f32.mrb[0].mxu0
        %482 = vmatprep.mubr.bf16.mxu0 0
        %483 = vmatmul.mubr.bf16.gmra.mrb[0].mxu0 %v359
        %v484 = vpop.f32.mrb[0].mxu0
        %v485 = vadd.f32 0.0, %v484
        %v486 = vpop.f32.mrb[0].mxu0
        %v487 = vpop.f32.mrb[0].mxu0
        %v488 = vadd.f32 0.0, %v487
        %v489 = vpop.f32.mrb[0].mxu0
        %490 = vmatprep.mubr.bf16.mxu0 0
        %491 = vmatmul.mubr.bf16.gmra.mrb[0].mxu0 %v362
        %v492 = vpop.f32.mrb[0].mxu0
        %v493 = vadd.f32 0.0, %v492
        %v494 = vpop.f32.mrb[0].mxu0
        %v495 = vpop.f32.mrb[0].mxu0
        %v496 = vadd.f32 0.0, %v495
        %v497 = vpop.f32.mrb[0].mxu0
        %498 = vmatprep.mubr.bf16.mxu0 0
        %499 = vmatmul.mubr.bf16.gmra.mrb[0].mxu0 %v365
        %v500 = vpop.f32.mrb[0].mxu0
        %v501 = vadd.f32 0.0, %v500
        %v502 = vpop.f32.mrb[0].mxu0
        %v503 = vpop.f32.mrb[0].mxu0
        %v504 = vadd.f32 0.0, %v503
        %v505 = vpop.f32.mrb[0].mxu0
        %506 = vmatprep.mubr.bf16.mxu0 0
        %507 = vmatmul.mubr.bf16.gmra.mrb[0].mxu0 %v368
        %v508 = vpop.f32.mrb[0].mxu0
        %v509 = vadd.f32 0.0, %v508
        %v510 = vpop.f32.mrb[0].mxu0
        %v511 = vpop.f32.mrb[0].mxu0
        %v512 = vadd.f32 0.0, %v511
        %v513 = vpop.f32.mrb[0].mxu0
        %514 = vmatprep.mubr.bf16.mxu0 0
        %515 = vmatmul.mubr.bf16.gmra.mrb[0].mxu0 %v371
        %v516 = vpop.f32.mrb[0].mxu0
        %v517 = vadd.f32 0.0, %v516
        %v518 = vpop.f32.mrb[0].mxu0
        %v519 = vpop.f32.mrb[0].mxu0
        %v520 = vadd.f32 0.0, %v519
        %v521 = vpop.f32.mrb[0].mxu0
        %522 = vmatprep.mubr.bf16.mxu0 0
        %523 = vmatmul.mubr.bf16.gmra.mrb[0].mxu0 %v374
        %v524 = vpop.f32.mrb[0].mxu0
        %v525 = vadd.f32 0.0, %v524
        %v526 = vpop.f32.mrb[0].mxu0
        %v527 = vpop.f32.mrb[0].mxu0
        %v528 = vadd.f32 0.0, %v527
        %v529 = vpop.f32.mrb[0].mxu0
        %530 = vmatprep.mubr.bf16.mxu0 0
        %531 = vmatmul.mubr.bf16.gmra.mrb[0].mxu0 %v377
        %v532 = vpop.f32.mrb[0].mxu0
        %v533 = vadd.f32 0.0, %v532
        %v534 = vpop.f32.mrb[0].mxu0
        %v535 = vpop.f32.mrb[0].mxu0
        %v536 = vadd.f32 0.0, %v535
        %v537 = vpop.f32.mrb[0].mxu0
        %538 = vmatprep.mubr.bf16.mxu0 0
        %539 = vmatmul.mubr.bf16.gmra.mrb[0].mxu0 %v380
        %v540 = vpop.f32.mrb[0].mxu0
        %v541 = vadd.f32 0.0, %v540
        %v542 = vpop.f32.mrb[0].mxu0
        %v543 = vpop.f32.mrb[0].mxu0
        %v544 = vadd.f32 0.0, %v543
        %v545 = vpop.f32.mrb[0].mxu0
        %546 = vdwg.mxu0
        %v547 = vpack.c.bf16 %v488, %v485
        %v548 = vpack.c.bf16 %v496, %v493
        %v549 = vpack.c.bf16 %v504, %v501
        %v550 = vpack.c.bf16 %v512, %v509
        %v551 = vpack.c.bf16 %v520, %v517
        %v552 = vpack.c.bf16 %v528, %v525
        %v553 = vpack.c.bf16 %v536, %v533
        %v554 = vpack.c.bf16 %v544, %v541
        %v555 = vld [vmem:[#allocation2] sm:$0xff]
        %v556 = vld [vmem:[#allocation2 + $0x8] sm:$0xff]
        %v557 = vld [vmem:[#allocation2 + $0x10] sm:$0xff]
        %v558 = vld [vmem:[#allocation2 + $0x18] sm:$0xff]
        %v559 = vld [vmem:[#allocation2 + $0x20] sm:$0xff]
        %v560 = vld [vmem:[#allocation2 + $0x28] sm:$0xff]
        %v561 = vld [vmem:[#allocation2 + $0x30] sm:$0xff]
        %v562 = vld [vmem:[#allocation2 + $0x38] sm:$0xff]
        %v563 = vld [vmem:[#allocation2 + $0x40] sm:$0xff]
        %v564 = vld [vmem:[#allocation2 + $0x48] sm:$0xff]
        %v565 = vld [vmem:[#allocation2 + $0x50] sm:$0xff]
        %v566 = vld [vmem:[#allocation2 + $0x58] sm:$0xff]
        %v567 = vld [vmem:[#allocation2 + $0x60] sm:$0xff]
        %v568 = vld [vmem:[#allocation2 + $0x68] sm:$0xff]
        %v569 = vld [vmem:[#allocation2 + $0x70] sm:$0xff]
        %v570 = vld [vmem:[#allocation2 + $0x78] sm:$0xff]
        %571 = vmax.xlane.f32.xlu0 %v421
        %v572 = vpop.xlane.xlu0 %571
        %573 = vmax.xlane.f32.xlu0 %v424
        %v574 = vpop.xlane.xlu0 %573
        %575 = vmax.xlane.f32.xlu0 %v429
        %v576 = vpop.xlane.xlu0 %575
        %577 = vmax.xlane.f32.xlu0 %v432
        %v578 = vpop.xlane.xlu0 %577
        %579 = vmax.xlane.f32.xlu0 %v437
        %v580 = vpop.xlane.xlu0 %579
        %581 = vmax.xlane.f32.xlu0 %v440
        %v582 = vpop.xlane.xlu0 %581
        %583 = vmax.xlane.f32.xlu0 %v445
        %v584 = vpop.xlane.xlu0 %583
        %585 = vmax.xlane.f32.xlu0 %v448
        %v586 = vpop.xlane.xlu0 %585
        %587 = vmax.xlane.f32.xlu0 %v453
        %v588 = vpop.xlane.xlu0 %587
        %589 = vmax.xlane.f32.xlu0 %v456
        %v590 = vpop.xlane.xlu0 %589
        %591 = vmax.xlane.f32.xlu0 %v461
        %v592 = vpop.xlane.xlu0 %591
        %593 = vmax.xlane.f32.xlu0 %v464
        %v594 = vpop.xlane.xlu0 %593
        %595 = vmax.xlane.f32.xlu0 %v469
        %v596 = vpop.xlane.xlu0 %595
        %597 = vmax.xlane.f32.xlu0 %v472
        %v598 = vpop.xlane.xlu0 %597
        %599 = vmax.xlane.f32.xlu0 %v477
        %v600 = vpop.xlane.xlu0 %599
        %601 = vmax.xlane.f32.xlu0 %v480
        %v602 = vpop.xlane.xlu0 %601
        %v603 = vmax.f32 %v555, %v572
        %v604 = vmax.f32 %v556, %v574
        %v605 = vmax.f32 %v557, %v576
        %v606 = vmax.f32 %v558, %v578
        %v607 = vmax.f32 %v559, %v580
        %v608 = vmax.f32 %v560, %v582
        %v609 = vmax.f32 %v561, %v584
        %v610 = vmax.f32 %v562, %v586
        %v611 = vmax.f32 %v563, %v588
        %v612 = vmax.f32 %v564, %v590
        %v613 = vmax.f32 %v565, %v592
        %v614 = vmax.f32 %v566, %v594
        %v615 = vmax.f32 %v567, %v596
        %v616 = vmax.f32 %v568, %v598
        %v617 = vmax.f32 %v569, %v600
        %v618 = vmax.f32 %v570, %v602
        %v619 = vsub.f32 %v555, %v603
        %v620 = vsub.f32 %v556, %v604
        %v621 = vsub.f32 %v557, %v605
        %v622 = vsub.f32 %v558, %v606
        %v623 = vsub.f32 %v559, %v607
        %v624 = vsub.f32 %v560, %v608
        %v625 = vsub.f32 %v561, %v609
        %v626 = vsub.f32 %v562, %v610
        %v627 = vsub.f32 %v563, %v611
        %v628 = vsub.f32 %v564, %v612
        %v629 = vsub.f32 %v565, %v613
        %v630 = vsub.f32 %v566, %v614
        %v631 = vsub.f32 %v567, %v615
        %v632 = vsub.f32 %v568, %v616
        %v633 = vsub.f32 %v569, %v617
        %v634 = vsub.f32 %v570, %v618
        %v635 = vmul.f32 %v619, 1.442695
        %v636 = vpow.pop %v635
        %v637 = vmul.f32 %v620, 1.442695
        %v638 = vpow.pop %v637
        %v639 = vmul.f32 %v621, 1.442695
        %v640 = vpow.pop %v639
        %v641 = vmul.f32 %v622, 1.442695
        %v642 = vpow.pop %v641
        %v643 = vmul.f32 %v623, 1.442695
        %v644 = vpow.pop %v643
        %v645 = vmul.f32 %v624, 1.442695
        %v646 = vpow.pop %v645
        %v647 = vmul.f32 %v625, 1.442695
        %v648 = vpow.pop %v647
        %v649 = vmul.f32 %v626, 1.442695
        %v650 = vpow.pop %v649
        %v651 = vmul.f32 %v627, 1.442695
        %v652 = vpow.pop %v651
        %v653 = vmul.f32 %v628, 1.442695
        %v654 = vpow.pop %v653
        %v655 = vmul.f32 %v629, 1.442695
        %v656 = vpow.pop %v655
        %v657 = vmul.f32 %v630, 1.442695
        %v658 = vpow.pop %v657
        %v659 = vmul.f32 %v631, 1.442695
        %v660 = vpow.pop %v659
        %v661 = vmul.f32 %v632, 1.442695
        %v662 = vpow.pop %v661
        %v663 = vmul.f32 %v633, 1.442695
        %v664 = vpow.pop %v663
        %v665 = vmul.f32 %v634, 1.442695
        %v666 = vpow.pop %v665
        %668 = vset.pattern.permute.xlu0 0
        %669 = vperm.xlu0 %668, %v603
        %v670 = vpop.permute.xlu0 %669
        %673 = vset.pattern.permute.xlu0 0
        %674 = vperm.xlu0 %673, %v604
        %v675 = vpop.permute.xlu0 %674
        %678 = vset.pattern.permute.xlu0 0
        %679 = vperm.xlu0 %678, %v605
        %v680 = vpop.permute.xlu0 %679
        %683 = vset.pattern.permute.xlu0 0
        %684 = vperm.xlu0 %683, %v606
        %v685 = vpop.permute.xlu0 %684
        %688 = vset.pattern.permute.xlu0 0
        %689 = vperm.xlu0 %688, %v607
        %v690 = vpop.permute.xlu0 %689
        %693 = vset.pattern.permute.xlu0 0
        %694 = vperm.xlu0 %693, %v608
        %v695 = vpop.permute.xlu0 %694
        %698 = vset.pattern.permute.xlu0 0
        %699 = vperm.xlu0 %698, %v609
        %v700 = vpop.permute.xlu0 %699
        %703 = vset.pattern.permute.xlu0 0
        %704 = vperm.xlu0 %703, %v610
        %v705 = vpop.permute.xlu0 %704
        %708 = vset.pattern.permute.xlu0 0
        %709 = vperm.xlu0 %708, %v611
        %v710 = vpop.permute.xlu0 %709
        %713 = vset.pattern.permute.xlu0 0
        %714 = vperm.xlu0 %713, %v612
        %v715 = vpop.permute.xlu0 %714
        %718 = vset.pattern.permute.xlu0 0
        %719 = vperm.xlu0 %718, %v613
        %v720 = vpop.permute.xlu0 %719
        %723 = vset.pattern.permute.xlu0 0
        %724 = vperm.xlu0 %723, %v614
        %v725 = vpop.permute.xlu0 %724
        %728 = vset.pattern.permute.xlu0 0
        %729 = vperm.xlu0 %728, %v615
        %v730 = vpop.permute.xlu0 %729
        %733 = vset.pattern.permute.xlu0 0
        %734 = vperm.xlu0 %733, %v616
        %v735 = vpop.permute.xlu0 %734
        %738 = vset.pattern.permute.xlu0 0
        %739 = vperm.xlu0 %738, %v617
        %v740 = vpop.permute.xlu0 %739
        %743 = vset.pattern.permute.xlu0 0
        %744 = vperm.xlu0 %743, %v618
        %v745 = vpop.permute.xlu0 %744
        %v747 = vsub.f32 %v421, %v670
        %v748 = vsub.f32 %v424, %v675
        %v749 = vsub.f32 %v429, %v680
        %v750 = vsub.f32 %v432, %v685
        %v751 = vsub.f32 %v437, %v690
        %v752 = vsub.f32 %v440, %v695
        %v753 = vsub.f32 %v445, %v700
        %v754 = vsub.f32 %v448, %v705
        %v755 = vsub.f32 %v453, %v710
        %v756 = vsub.f32 %v456, %v715
        %v757 = vsub.f32 %v461, %v720
        %v758 = vsub.f32 %v464, %v725
        %v759 = vsub.f32 %v469, %v730
        %v760 = vsub.f32 %v472, %v735
        %v761 = vsub.f32 %v477, %v740
        %v762 = vsub.f32 %v480, %v745
        %v763 = vmul.f32 %v747, 1.442695
        %v764 = vpow.pop %v763
        %v765 = vmul.f32 %v748, 1.442695
        %v766 = vpow.pop %v765
        %v767 = vmul.f32 %v749, 1.442695
        %v768 = vpow.pop %v767
        %v769 = vmul.f32 %v750, 1.442695
        %v770 = vpow.pop %v769
        %v771 = vmul.f32 %v751, 1.442695
        %v772 = vpow.pop %v771
        %v773 = vmul.f32 %v752, 1.442695
        %v774 = vpow.pop %v773
        %v775 = vmul.f32 %v753, 1.442695
        %v776 = vpow.pop %v775
        %v777 = vmul.f32 %v754, 1.442695
        %v778 = vpow.pop %v777
        %v779 = vmul.f32 %v755, 1.442695
        %v780 = vpow.pop %v779
        %v781 = vmul.f32 %v756, 1.442695
        %v782 = vpow.pop %v781
        %v783 = vmul.f32 %v757, 1.442695
        %v784 = vpow.pop %v783
        %v785 = vmul.f32 %v758, 1.442695
        %v786 = vpow.pop %v785
        %v787 = vmul.f32 %v759, 1.442695
        %v788 = vpow.pop %v787
        %v789 = vmul.f32 %v760, 1.442695
        %v790 = vpow.pop %v789
        %v791 = vmul.f32 %v761, 1.442695
        %v792 = vpow.pop %v791
        %v793 = vmul.f32 %v762, 1.442695
        %v794 = vpow.pop %v793
        %v795 = vld [vmem:[#allocation3] sm:$0xff]
        %v796 = vld [vmem:[#allocation3 + $0x8] sm:$0xff]
        %v797 = vld [vmem:[#allocation3 + $0x10] sm:$0xff]
        %v798 = vld [vmem:[#allocation3 + $0x18] sm:$0xff]
        %v799 = vld [vmem:[#allocation3 + $0x20] sm:$0xff]
        %v800 = vld [vmem:[#allocation3 + $0x28] sm:$0xff]
        %v801 = vld [vmem:[#allocation3 + $0x30] sm:$0xff]
        %v802 = vld [vmem:[#allocation3 + $0x38] sm:$0xff]
        %v803 = vld [vmem:[#allocation3 + $0x40] sm:$0xff]
        %v804 = vld [vmem:[#allocation3 + $0x48] sm:$0xff]
        %v805 = vld [vmem:[#allocation3 + $0x50] sm:$0xff]
        %v806 = vld [vmem:[#allocation3 + $0x58] sm:$0xff]
        %v807 = vld [vmem:[#allocation3 + $0x60] sm:$0xff]
        %v808 = vld [vmem:[#allocation3 + $0x68] sm:$0xff]
        %v809 = vld [vmem:[#allocation3 + $0x70] sm:$0xff]
        %v810 = vld [vmem:[#allocation3 + $0x78] sm:$0xff]
        %v811 = vmul.f32 %v636, %v795
        %v812 = vmul.f32 %v638, %v796
        %v813 = vmul.f32 %v640, %v797
        %v814 = vmul.f32 %v642, %v798
        %v815 = vmul.f32 %v644, %v799
        %v816 = vmul.f32 %v646, %v800
        %v817 = vmul.f32 %v648, %v801
        %v818 = vmul.f32 %v650, %v802
        %v819 = vmul.f32 %v652, %v803
        %v820 = vmul.f32 %v654, %v804
        %v821 = vmul.f32 %v656, %v805
        %v822 = vmul.f32 %v658, %v806
        %v823 = vmul.f32 %v660, %v807
        %v824 = vmul.f32 %v662, %v808
        %v825 = vmul.f32 %v664, %v809
        %v826 = vmul.f32 %v666, %v810
        %827 = vadd.xlane.f32.xlu0 %v764
        %v828 = vpop.xlane.xlu0 %827
        %829 = vadd.xlane.f32.xlu0 %v766
        %v830 = vpop.xlane.xlu0 %829
        %831 = vadd.xlane.f32.xlu0 %v768
        %v832 = vpop.xlane.xlu0 %831
        %833 = vadd.xlane.f32.xlu0 %v770
        %v834 = vpop.xlane.xlu0 %833
        %835 = vadd.xlane.f32.xlu0 %v772
        %v836 = vpop.xlane.xlu0 %835
        %837 = vadd.xlane.f32.xlu0 %v774
        %v838 = vpop.xlane.xlu0 %837
        %839 = vadd.xlane.f32.xlu0 %v776
        %v840 = vpop.xlane.xlu0 %839
        %841 = vadd.xlane.f32.xlu0 %v778
        %v842 = vpop.xlane.xlu0 %841
        %843 = vadd.xlane.f32.xlu0 %v780
        %v844 = vpop.xlane.xlu0 %843
        %845 = vadd.xlane.f32.xlu0 %v782
        %v846 = vpop.xlane.xlu0 %845
        %847 = vadd.xlane.f32.xlu0 %v784
        %v848 = vpop.xlane.xlu0 %847
        %849 = vadd.xlane.f32.xlu0 %v786
        %v850 = vpop.xlane.xlu0 %849
        %851 = vadd.xlane.f32.xlu0 %v788
        %v852 = vpop.xlane.xlu0 %851
        %853 = vadd.xlane.f32.xlu0 %v790
        %v854 = vpop.xlane.xlu0 %853
        %855 = vadd.xlane.f32.xlu0 %v792
        %v856 = vpop.xlane.xlu0 %855
        %857 = vadd.xlane.f32.xlu0 %v794
        %v858 = vpop.xlane.xlu0 %857
        %v859 = vadd.f32 %v811, %v828
        %v860 = vadd.f32 %v812, %v830
        %v861 = vadd.f32 %v813, %v832
        %v862 = vadd.f32 %v814, %v834
        %v863 = vadd.f32 %v815, %v836
        %v864 = vadd.f32 %v816, %v838
        %v865 = vadd.f32 %v817, %v840
        %v866 = vadd.f32 %v818, %v842
        %v867 = vadd.f32 %v819, %v844
        %v868 = vadd.f32 %v820, %v846
        %v869 = vadd.f32 %v821, %v848
        %v870 = vadd.f32 %v822, %v850
        %v871 = vadd.f32 %v823, %v852
        %v872 = vadd.f32 %v824, %v854
        %v873 = vadd.f32 %v825, %v856
        %v874 = vadd.f32 %v826, %v858
        %vm875 = vcmask 7168
        %876 = vst.msk [vmem:[#allocation3] sm:$0xff] %vm875, %v859
        %877 = vst.msk [vmem:[#allocation3 + $0x8] sm:$0xff] %vm875, %v860
        %878 = vst.msk [vmem:[#allocation3 + $0x10] sm:$0xff] %vm875, %v861
        %879 = vst.msk [vmem:[#allocation3 + $0x18] sm:$0xff] %vm875, %v862
        %880 = vst.msk [vmem:[#allocation3 + $0x20] sm:$0xff] %vm875, %v863
        %881 = vst.msk [vmem:[#allocation3 + $0x28] sm:$0xff] %vm875, %v864
        %882 = vst.msk [vmem:[#allocation3 + $0x30] sm:$0xff] %vm875, %v865
        %883 = vst.msk [vmem:[#allocation3 + $0x38] sm:$0xff] %vm875, %v866
        %884 = vst.msk [vmem:[#allocation3 + $0x40] sm:$0xff] %vm875, %v867
        %885 = vst.msk [vmem:[#allocation3 + $0x48] sm:$0xff] %vm875, %v868
        %886 = vst.msk [vmem:[#allocation3 + $0x50] sm:$0xff] %vm875, %v869
        %887 = vst.msk [vmem:[#allocation3 + $0x58] sm:$0xff] %vm875, %v870
        %888 = vst.msk [vmem:[#allocation3 + $0x60] sm:$0xff] %vm875, %v871
        %889 = vst.msk [vmem:[#allocation3 + $0x68] sm:$0xff] %vm875, %v872
        %890 = vst.msk [vmem:[#allocation3 + $0x70] sm:$0xff] %vm875, %v873
        %891 = vst.msk [vmem:[#allocation3 + $0x78] sm:$0xff] %vm875, %v874
        %892 = vst.msk [vmem:[#allocation2] sm:$0xff] %vm875, %v603
        %893 = vst.msk [vmem:[#allocation2 + $0x8] sm:$0xff] %vm875, %v604
        %894 = vst.msk [vmem:[#allocation2 + $0x10] sm:$0xff] %vm875, %v605
        %895 = vst.msk [vmem:[#allocation2 + $0x18] sm:$0xff] %vm875, %v606
        %896 = vst.msk [vmem:[#allocation2 + $0x20] sm:$0xff] %vm875, %v607
        %897 = vst.msk [vmem:[#allocation2 + $0x28] sm:$0xff] %vm875, %v608
        %898 = vst.msk [vmem:[#allocation2 + $0x30] sm:$0xff] %vm875, %v609
        %899 = vst.msk [vmem:[#allocation2 + $0x38] sm:$0xff] %vm875, %v610
        %900 = vst.msk [vmem:[#allocation2 + $0x40] sm:$0xff] %vm875, %v611
        %901 = vst.msk [vmem:[#allocation2 + $0x48] sm:$0xff] %vm875, %v612
        %902 = vst.msk [vmem:[#allocation2 + $0x50] sm:$0xff] %vm875, %v613
        %903 = vst.msk [vmem:[#allocation2 + $0x58] sm:$0xff] %vm875, %v614
        %904 = vst.msk [vmem:[#allocation2 + $0x60] sm:$0xff] %vm875, %v615
        %905 = vst.msk [vmem:[#allocation2 + $0x68] sm:$0xff] %vm875, %v616
        %906 = vst.msk [vmem:[#allocation2 + $0x70] sm:$0xff] %vm875, %v617
        %907 = vst.msk [vmem:[#allocation2 + $0x78] sm:$0xff] %vm875, %v618
        %v908 = vpack.c.bf16 %v766, %v764
        %v909 = vpack.c.bf16 %v770, %v768
        %v910 = vpack.c.bf16 %v774, %v772
        %v911 = vpack.c.bf16 %v778, %v776
        %v912 = vpack.c.bf16 %v782, %v780
        %v913 = vpack.c.bf16 %v786, %v784
        %v914 = vpack.c.bf16 %v790, %v788
        %v915 = vpack.c.bf16 %v794, %v792
        %916 = vmatprep.subr.bf16.mxu0 0
        %917 = vmatpush1.bf16.xpose.msra.mxu0 %v547
        %918 = vmatprep.subr.bf16.mxu0 0
        %919 = vmatpush1.bf16.xpose.msra.mxu0 %v548
        %920 = vmatprep.subr.bf16.mxu0 0
        %921 = vmatpush1.bf16.xpose.msra.mxu0 0
        %922 = vmatprep.subr.bf16.mxu0 0
        %923 = vmatpush1.bf16.xpose.msra.mxu0 0
        %924 = vmatprep.subr.bf16.mxu0 0
        %925 = vmatpush1.bf16.xpose.msra.mxu0 0
        %926 = vmatprep.subr.bf16.mxu0 0
        %927 = vmatpush1.bf16.xpose.msra.mxu0 0
        %928 = vmatprep.subr.bf16.mxu0 0
        %929 = vmatpush1.bf16.xpose.msra.mxu0 0
        %930 = vmatprep.subr.bf16.mxu0 0
        %931 = vmatpush1.bf16.xpose.msra.mxu0 0
        %932 = vmatprep.subr.bf16.mxu0 0
        %933 = vmatpush1.bf16.xpose.msra.mxu0 0
        %934 = vmatprep.subr.bf16.mxu0 0
        %935 = vmatpush1.bf16.xpose.msra.mxu0 0
        %936 = vmatprep.subr.bf16.mxu0 0
        %937 = vmatpush1.bf16.xpose.msra.mxu0 0
        %938 = vmatprep.subr.bf16.mxu0 0
        %939 = vmatpush1.bf16.xpose.msra.mxu0 0
        %940 = vmatprep.subr.bf16.mxu0 0
        %941 = vmatpush1.bf16.xpose.msra.mxu0 0
        %942 = vmatprep.subr.bf16.mxu0 0
        %943 = vmatpush1.bf16.xpose.msra.mxu0 0
        %944 = vmatprep.subr.bf16.mxu0 0
        %945 = vmatpush1.bf16.xpose.msra.mxu0 0
        %946 = vmatprep.subr.bf16.mxu0 0
        %947 = vmatpush1.bf16.xpose.msra.mxu0 0
        %948 = vmatprep.mubr.bf16.mxu0 0
        %949 = vmatmul.mubr.bf16.gmra.mrb[0].mxu0 %v908
        %v950 = vpop.f32.mrb[0].mxu0
        %v951 = vadd.f32 0.0, %v950
        %v952 = vpop.f32.mrb[0].mxu0
        %v953 = vpop.f32.mrb[0].mxu0
        %v954 = vadd.f32 0.0, %v953
        %v955 = vpop.f32.mrb[0].mxu0
        %956 = vmatprep.mubr.bf16.mxu0 0
        %957 = vmatmul.mubr.bf16.gmra.mrb[0].mxu0 %v909
        %v958 = vpop.f32.mrb[0].mxu0
        %v959 = vadd.f32 0.0, %v958
        %v960 = vpop.f32.mrb[0].mxu0
        %v961 = vpop.f32.mrb[0].mxu0
        %v962 = vadd.f32 0.0, %v961
        %v963 = vpop.f32.mrb[0].mxu0
        %964 = vdwg.mxu0
        %965 = vmatprep.subr.bf16.mxu0 0
        %966 = vmatpush1.bf16.xpose.msra.mxu0 %v549
        %967 = vmatprep.subr.bf16.mxu0 0
        %968 = vmatpush1.bf16.xpose.msra.mxu0 %v550
        %969 = vmatprep.subr.bf16.mxu0 0
        %970 = vmatpush1.bf16.xpose.msra.mxu0 0
        %971 = vmatprep.subr.bf16.mxu0 0
        %972 = vmatpush1.bf16.xpose.msra.mxu0 0
        %973 = vmatprep.subr.bf16.mxu0 0
        %974 = vmatpush1.bf16.xpose.msra.mxu0 0
        %975 = vmatprep.subr.bf16.mxu0 0
        %976 = vmatpush1.bf16.xpose.msra.mxu0 0
        %977 = vmatprep.subr.bf16.mxu0 0
        %978 = vmatpush1.bf16.xpose.msra.mxu0 0
        %979 = vmatprep.subr.bf16.mxu0 0
        %980 = vmatpush1.bf16.xpose.msra.mxu0 0
        %981 = vmatprep.subr.bf16.mxu0 0
        %982 = vmatpush1.bf16.xpose.msra.mxu0 0
        %983 = vmatprep.subr.bf16.mxu0 0
        %984 = vmatpush1.bf16.xpose.msra.mxu0 0
        %985 = vmatprep.subr.bf16.mxu0 0
        %986 = vmatpush1.bf16.xpose.msra.mxu0 0
        %987 = vmatprep.subr.bf16.mxu0 0
        %988 = vmatpush1.bf16.xpose.msra.mxu0 0
        %989 = vmatprep.subr.bf16.mxu0 0
        %990 = vmatpush1.bf16.xpose.msra.mxu0 0
        %991 = vmatprep.subr.bf16.mxu0 0
        %992 = vmatpush1.bf16.xpose.msra.mxu0 0
        %993 = vmatprep.subr.bf16.mxu0 0
        %994 = vmatpush1.bf16.xpose.msra.mxu0 0
        %995 = vmatprep.subr.bf16.mxu0 0
        %996 = vmatpush1.bf16.xpose.msra.mxu0 0
        %997 = vmatprep.mubr.bf16.mxu0 0
        %998 = vmatmul.mubr.bf16.gmra.mrb[0].mxu0 %v910
        %v999 = vpop.f32.mrb[0].mxu0
        %v1000 = vadd.f32 0.0, %v999
        %v1001 = vpop.f32.mrb[0].mxu0
        %v1002 = vpop.f32.mrb[0].mxu0
        %v1003 = vadd.f32 0.0, %v1002
        %v1004 = vpop.f32.mrb[0].mxu0
        %1005 = vmatprep.mubr.bf16.mxu0 0
        %1006 = vmatmul.mubr.bf16.gmra.mrb[0].mxu0 %v911
        %v1007 = vpop.f32.mrb[0].mxu0
        %v1008 = vadd.f32 0.0, %v1007
        %v1009 = vpop.f32.mrb[0].mxu0
        %v1010 = vpop.f32.mrb[0].mxu0
        %v1011 = vadd.f32 0.0, %v1010
        %v1012 = vpop.f32.mrb[0].mxu0
        %1013 = vdwg.mxu0
        %1014 = vmatprep.subr.bf16.mxu0 0
        %1015 = vmatpush1.bf16.xpose.msra.mxu0 %v551
        %1016 = vmatprep.subr.bf16.mxu0 0
        %1017 = vmatpush1.bf16.xpose.msra.mxu0 %v552
        %1018 = vmatprep.subr.bf16.mxu0 0
        %1019 = vmatpush1.bf16.xpose.msra.mxu0 0
        %1020 = vmatprep.subr.bf16.mxu0 0
        %1021 = vmatpush1.bf16.xpose.msra.mxu0 0
        %1022 = vmatprep.subr.bf16.mxu0 0
        %1023 = vmatpush1.bf16.xpose.msra.mxu0 0
        %1024 = vmatprep.subr.bf16.mxu0 0
        %1025 = vmatpush1.bf16.xpose.msra.mxu0 0
        %1026 = vmatprep.subr.bf16.mxu0 0
        %1027 = vmatpush1.bf16.xpose.msra.mxu0 0
        %1028 = vmatprep.subr.bf16.mxu0 0
        %1029 = vmatpush1.bf16.xpose.msra.mxu0 0
        %1030 = vmatprep.subr.bf16.mxu0 0
        %1031 = vmatpush1.bf16.xpose.msra.mxu0 0
        %1032 = vmatprep.subr.bf16.mxu0 0
        %1033 = vmatpush1.bf16.xpose.msra.mxu0 0
        %1034 = vmatprep.subr.bf16.mxu0 0
        %1035 = vmatpush1.bf16.xpose.msra.mxu0 0
        %1036 = vmatprep.subr.bf16.mxu0 0
        %1037 = vmatpush1.bf16.xpose.msra.mxu0 0
        %1038 = vmatprep.subr.bf16.mxu0 0
        %1039 = vmatpush1.bf16.xpose.msra.mxu0 0
        %1040 = vmatprep.subr.bf16.mxu0 0
        %1041 = vmatpush1.bf16.xpose.msra.mxu0 0
        %1042 = vmatprep.subr.bf16.mxu0 0
        %1043 = vmatpush1.bf16.xpose.msra.mxu0 0
        %1044 = vmatprep.subr.bf16.mxu0 0
        %1045 = vmatpush1.bf16.xpose.msra.mxu0 0
        %1046 = vmatprep.mubr.bf16.mxu0 0
        %1047 = vmatmul.mubr.bf16.gmra.mrb[0].mxu0 %v912
        %v1048 = vpop.f32.mrb[0].mxu0
        %v1049 = vadd.f32 0.0, %v1048
        %v1050 = vpop.f32.mrb[0].mxu0
        %v1051 = vpop.f32.mrb[0].mxu0
        %v1052 = vadd.f32 0.0, %v1051
        %v1053 = vpop.f32.mrb[0].mxu0
        %1054 = vmatprep.mubr.bf16.mxu0 0
        %1055 = vmatmul.mubr.bf16.gmra.mrb[0].mxu0 %v913
        %v1056 = vpop.f32.mrb[0].mxu0
        %v1057 = vadd.f32 0.0, %v1056
        %v1058 = vpop.f32.mrb[0].mxu0
        %v1059 = vpop.f32.mrb[0].mxu0
        %v1060 = vadd.f32 0.0, %v1059
        %v1061 = vpop.f32.mrb[0].mxu0
        %1062 = vdwg.mxu0
        %1063 = vmatprep.subr.bf16.mxu0 0
        %1064 = vmatpush1.bf16.xpose.msra.mxu0 %v553
        %1065 = vmatprep.subr.bf16.mxu0 0
        %1066 = vmatpush1.bf16.xpose.msra.mxu0 %v554
        %1067 = vmatprep.subr.bf16.mxu0 0
        %1068 = vmatpush1.bf16.xpose.msra.mxu0 0
        %1069 = vmatprep.subr.bf16.mxu0 0
        %1070 = vmatpush1.bf16.xpose.msra.mxu0 0
        %1071 = vmatprep.subr.bf16.mxu0 0
        %1072 = vmatpush1.bf16.xpose.msra.mxu0 0
        %1073 = vmatprep.subr.bf16.mxu0 0
        %1074 = vmatpush1.bf16.xpose.msra.mxu0 0
        %1075 = vmatprep.subr.bf16.mxu0 0
        %1076 = vmatpush1.bf16.xpose.msra.mxu0 0
        %1077 = vmatprep.subr.bf16.mxu0 0
        %1078 = vmatpush1.bf16.xpose.msra.mxu0 0
        %1079 = vmatprep.subr.bf16.mxu0 0
        %1080 = vmatpush1.bf16.xpose.msra.mxu0 0
        %1081 = vmatprep.subr.bf16.mxu0 0
        %1082 = vmatpush1.bf16.xpose.msra.mxu0 0
        %1083 = vmatprep.subr.bf16.mxu0 0
        %1084 = vmatpush1.bf16.xpose.msra.mxu0 0
        %1085 = vmatprep.subr.bf16.mxu0 0
        %1086 = vmatpush1.bf16.xpose.msra.mxu0 0
        %1087 = vmatprep.subr.bf16.mxu0 0
        %1088 = vmatpush1.bf16.xpose.msra.mxu0 0
        %1089 = vmatprep.subr.bf16.mxu0 0
        %1090 = vmatpush1.bf16.xpose.msra.mxu0 0
        %1091 = vmatprep.subr.bf16.mxu0 0
        %1092 = vmatpush1.bf16.xpose.msra.mxu0 0
        %1093 = vmatprep.subr.bf16.mxu0 0
        %1094 = vmatpush1.bf16.xpose.msra.mxu0 0
        %1095 = vmatprep.mubr.bf16.mxu0 0
        %1096 = vmatmul.mubr.bf16.gmra.mrb[0].mxu0 %v914
        %v1097 = vpop.f32.mrb[0].mxu0
        %v1098 = vadd.f32 0.0, %v1097
        %v1099 = vpop.f32.mrb[0].mxu0
        %v1100 = vpop.f32.mrb[0].mxu0
        %v1101 = vadd.f32 0.0, %v1100
        %v1102 = vpop.f32.mrb[0].mxu0
        %1103 = vmatprep.mubr.bf16.mxu0 0
        %1104 = vmatmul.mubr.bf16.gmra.mrb[0].mxu0 %v915
        %v1105 = vpop.f32.mrb[0].mxu0
        %v1106 = vadd.f32 0.0, %v1105
        %v1107 = vpop.f32.mrb[0].mxu0
        %v1108 = vpop.f32.mrb[0].mxu0
        %v1109 = vadd.f32 0.0, %v1108
        %v1110 = vpop.f32.mrb[0].mxu0
        %1111 = vdwg.mxu0
        %v1112 = vld [vmem:[#allocation4] sm:$0xff]
        %v1113 = vld [vmem:[#allocation4 + $0x8] sm:$0xff]
        %v1114 = vld [vmem:[#allocation4 + $0x10] sm:$0xff]
        %v1115 = vld [vmem:[#allocation4 + $0x18] sm:$0xff]
        %v1116 = vld [vmem:[#allocation4 + $0x20] sm:$0xff]
        %v1117 = vld [vmem:[#allocation4 + $0x28] sm:$0xff]
        %v1118 = vld [vmem:[#allocation4 + $0x30] sm:$0xff]
        %v1119 = vld [vmem:[#allocation4 + $0x38] sm:$0xff]
        %v1120 = vld [vmem:[#allocation4 + $0x40] sm:$0xff]
        %v1121 = vld [vmem:[#allocation4 + $0x48] sm:$0xff]
        %v1122 = vld [vmem:[#allocation4 + $0x50] sm:$0xff]
        %v1123 = vld [vmem:[#allocation4 + $0x58] sm:$0xff]
        %v1124 = vld [vmem:[#allocation4 + $0x60] sm:$0xff]
        %v1125 = vld [vmem:[#allocation4 + $0x68] sm:$0xff]
        %v1126 = vld [vmem:[#allocation4 + $0x70] sm:$0xff]
        %v1127 = vld [vmem:[#allocation4 + $0x78] sm:$0xff]
        %1129 = vset.pattern.permute.xlu0 0
        %1130 = vperm.xlu0 %1129, %v636
        %v1131 = vpop.permute.xlu0 %1130
        %1134 = vset.pattern.permute.xlu0 0
        %1135 = vperm.xlu0 %1134, %v638
        %v1136 = vpop.permute.xlu0 %1135
        %1139 = vset.pattern.permute.xlu0 0
        %1140 = vperm.xlu0 %1139, %v640
        %v1141 = vpop.permute.xlu0 %1140
        %1144 = vset.pattern.permute.xlu0 0
        %1145 = vperm.xlu0 %1144, %v642
        %v1146 = vpop.permute.xlu0 %1145
        %1149 = vset.pattern.permute.xlu0 0
        %1150 = vperm.xlu0 %1149, %v644
        %v1151 = vpop.permute.xlu0 %1150
        %1154 = vset.pattern.permute.xlu0 0
        %1155 = vperm.xlu0 %1154, %v646
        %v1156 = vpop.permute.xlu0 %1155
        %1159 = vset.pattern.permute.xlu0 0
        %1160 = vperm.xlu0 %1159, %v648
        %v1161 = vpop.permute.xlu0 %1160
        %1164 = vset.pattern.permute.xlu0 0
        %1165 = vperm.xlu0 %1164, %v650
        %v1166 = vpop.permute.xlu0 %1165
        %1169 = vset.pattern.permute.xlu0 0
        %1170 = vperm.xlu0 %1169, %v652
        %v1171 = vpop.permute.xlu0 %1170
        %1174 = vset.pattern.permute.xlu0 0
        %1175 = vperm.xlu0 %1174, %v654
        %v1176 = vpop.permute.xlu0 %1175
        %1179 = vset.pattern.permute.xlu0 0
        %1180 = vperm.xlu0 %1179, %v656
        %v1181 = vpop.permute.xlu0 %1180
        %1184 = vset.pattern.permute.xlu0 0
        %1185 = vperm.xlu0 %1184, %v658
        %v1186 = vpop.permute.xlu0 %1185
        %1189 = vset.pattern.permute.xlu0 0
        %1190 = vperm.xlu0 %1189, %v660
        %v1191 = vpop.permute.xlu0 %1190
        %1194 = vset.pattern.permute.xlu0 0
        %1195 = vperm.xlu0 %1194, %v662
        %v1196 = vpop.permute.xlu0 %1195
        %1199 = vset.pattern.permute.xlu0 0
        %1200 = vperm.xlu0 %1199, %v664
        %v1201 = vpop.permute.xlu0 %1200
        %1204 = vset.pattern.permute.xlu0 0
        %1205 = vperm.xlu0 %1204, %v666
        %v1206 = vpop.permute.xlu0 %1205
        %v1208 = vmul.f32 %v1131, %v1112
        %v1209 = vmul.f32 %v1136, %v1113
        %v1210 = vmul.f32 %v1141, %v1114
        %v1211 = vmul.f32 %v1146, %v1115
        %v1212 = vmul.f32 %v1151, %v1116
        %v1213 = vmul.f32 %v1156, %v1117
        %v1214 = vmul.f32 %v1161, %v1118
        %v1215 = vmul.f32 %v1166, %v1119
        %v1216 = vmul.f32 %v1171, %v1120
        %v1217 = vmul.f32 %v1176, %v1121
        %v1218 = vmul.f32 %v1181, %v1122
        %v1219 = vmul.f32 %v1186, %v1123
        %v1220 = vmul.f32 %v1191, %v1124
        %v1221 = vmul.f32 %v1196, %v1125
        %v1222 = vmul.f32 %v1201, %v1126
        %v1223 = vmul.f32 %v1206, %v1127
        %v1224 = vadd.f32 %v1208, %v951
        %v1225 = vadd.f32 %v1209, %v954
        %v1226 = vadd.f32 %v1210, %v959
        %v1227 = vadd.f32 %v1211, %v962
        %v1228 = vadd.f32 %v1212, %v1000
        %v1229 = vadd.f32 %v1213, %v1003
        %v1230 = vadd.f32 %v1214, %v1008
        %v1231 = vadd.f32 %v1215, %v1011
        %v1232 = vadd.f32 %v1216, %v1049
        %v1233 = vadd.f32 %v1217, %v1052
        %v1234 = vadd.f32 %v1218, %v1057
        %v1235 = vadd.f32 %v1219, %v1060
        %v1236 = vadd.f32 %v1220, %v1098
        %v1237 = vadd.f32 %v1221, %v1101
        %v1238 = vadd.f32 %v1222, %v1106
        %v1239 = vadd.f32 %v1223, %v1109
        %vm1240 = vcmask 261120
        %1241 = vst.msk [vmem:[#allocation4] sm:$0xff] %vm1240, %v1224
        %1242 = vst.msk [vmem:[#allocation4 + $0x8] sm:$0xff] %vm1240, %v1225
        %1243 = vst.msk [vmem:[#allocation4 + $0x10] sm:$0xff] %vm1240, %v1226
        %1244 = vst.msk [vmem:[#allocation4 + $0x18] sm:$0xff] %vm1240, %v1227
        %1245 = vst.msk [vmem:[#allocation4 + $0x20] sm:$0xff] %vm1240, %v1228
        %1246 = vst.msk [vmem:[#allocation4 + $0x28] sm:$0xff] %vm1240, %v1229
        %1247 = vst.msk [vmem:[#allocation4 + $0x30] sm:$0xff] %vm1240, %v1230
        %1248 = vst.msk [vmem:[#allocation4 + $0x38] sm:$0xff] %vm1240, %v1231
        %1249 = vst.msk [vmem:[#allocation4 + $0x40] sm:$0xff] %vm1240, %v1232
        %1250 = vst.msk [vmem:[#allocation4 + $0x48] sm:$0xff] %vm1240, %v1233
        %1251 = vst.msk [vmem:[#allocation4 + $0x50] sm:$0xff] %vm1240, %v1234
        %1252 = vst.msk [vmem:[#allocation4 + $0x58] sm:$0xff] %vm1240, %v1235
        %1253 = vst.msk [vmem:[#allocation4 + $0x60] sm:$0xff] %vm1240, %v1236
        %1254 = vst.msk [vmem:[#allocation4 + $0x68] sm:$0xff] %vm1240, %v1237
        %1255 = vst.msk [vmem:[#allocation4 + $0x70] sm:$0xff] %vm1240, %v1238
        %1256 = vst.msk [vmem:[#allocation4 + $0x78] sm:$0xff] %vm1240, %v1239
        %p1257 = scmp.eq.s32.totalorder %s21, 1
        // Predicated region
        $region33: #{tpu_custom_call.1} parent=27 // pred_check
          %p1258 = pneg %p1257
        $region34: #{tpu_custom_call.1} parent=27 // pred_check_branch
          %1260 = sbr.rel (%p1258) target = $region36
        $region35: #{tpu_custom_call.1} parent=27 // pred_region
          %v1261 = vld [vmem:[#allocation3] sm:$0xff]
          %v1262 = vld [vmem:[#allocation3 + $0x8] sm:$0xff]
          %v1263 = vld [vmem:[#allocation3 + $0x10] sm:$0xff]
          %v1264 = vld [vmem:[#allocation3 + $0x18] sm:$0xff]
          %v1265 = vld [vmem:[#allocation3 + $0x20] sm:$0xff]
          %v1266 = vld [vmem:[#allocation3 + $0x28] sm:$0xff]
          %v1267 = vld [vmem:[#allocation3 + $0x30] sm:$0xff]
          %v1268 = vld [vmem:[#allocation3 + $0x38] sm:$0xff]
          %v1269 = vld [vmem:[#allocation3 + $0x40] sm:$0xff]
          %v1270 = vld [vmem:[#allocation3 + $0x48] sm:$0xff]
          %v1271 = vld [vmem:[#allocation3 + $0x50] sm:$0xff]
          %v1272 = vld [vmem:[#allocation3 + $0x58] sm:$0xff]
          %v1273 = vld [vmem:[#allocation3 + $0x60] sm:$0xff]
          %v1274 = vld [vmem:[#allocation3 + $0x68] sm:$0xff]
          %v1275 = vld [vmem:[#allocation3 + $0x70] sm:$0xff]
          %v1276 = vld [vmem:[#allocation3 + $0x78] sm:$0xff]
          %v1277 = vrcp.pop %v1261
          %v1278 = vrcp.pop %v1262
          %v1279 = vrcp.pop %v1263
          %v1280 = vrcp.pop %v1264
          %v1281 = vrcp.pop %v1265
          %v1282 = vrcp.pop %v1266
          %v1283 = vrcp.pop %v1267
          %v1284 = vrcp.pop %v1268
          %v1285 = vrcp.pop %v1269
          %v1286 = vrcp.pop %v1270
          %v1287 = vrcp.pop %v1271
          %v1288 = vrcp.pop %v1272
          %v1289 = vrcp.pop %v1273
          %v1290 = vrcp.pop %v1274
          %v1291 = vrcp.pop %v1275
          %v1292 = vrcp.pop %v1276
          %v1293 = vld [vmem:[#allocation4] sm:$0xff]
          %v1294 = vld [vmem:[#allocation4 + $0x8] sm:$0xff]
          %v1295 = vld [vmem:[#allocation4 + $0x10] sm:$0xff]
          %v1296 = vld [vmem:[#allocation4 + $0x18] sm:$0xff]
          %v1297 = vld [vmem:[#allocation4 + $0x20] sm:$0xff]
          %v1298 = vld [vmem:[#allocation4 + $0x28] sm:$0xff]
          %v1299 = vld [vmem:[#allocation4 + $0x30] sm:$0xff]
          %v1300 = vld [vmem:[#allocation4 + $0x38] sm:$0xff]
          %v1301 = vld [vmem:[#allocation4 + $0x40] sm:$0xff]
          %v1302 = vld [vmem:[#allocation4 + $0x48] sm:$0xff]
          %v1303 = vld [vmem:[#allocation4 + $0x50] sm:$0xff]
          %v1304 = vld [vmem:[#allocation4 + $0x58] sm:$0xff]
          %v1305 = vld [vmem:[#allocation4 + $0x60] sm:$0xff]
          %v1306 = vld [vmem:[#allocation4 + $0x68] sm:$0xff]
          %v1307 = vld [vmem:[#allocation4 + $0x70] sm:$0xff]
          %v1308 = vld [vmem:[#allocation4 + $0x78] sm:$0xff]
          %1310 = vset.pattern.permute.xlu0 0
          %1311 = vperm.xlu0 %1310, %v1277
          %v1312 = vpop.permute.xlu0 %1311
          %1315 = vset.pattern.permute.xlu0 0
          %1316 = vperm.xlu0 %1315, %v1278
          %v1317 = vpop.permute.xlu0 %1316
          %1320 = vset.pattern.permute.xlu0 0
          %1321 = vperm.xlu0 %1320, %v1279
          %v1322 = vpop.permute.xlu0 %1321
          %1325 = vset.pattern.permute.xlu0 0
          %1326 = vperm.xlu0 %1325, %v1280
          %v1327 = vpop.permute.xlu0 %1326
          %1330 = vset.pattern.permute.xlu0 0
          %1331 = vperm.xlu0 %1330, %v1281
          %v1332 = vpop.permute.xlu0 %1331
          %1335 = vset.pattern.permute.xlu0 0
          %1336 = vperm.xlu0 %1335, %v1282
          %v1337 = vpop.permute.xlu0 %1336
          %1340 = vset.pattern.permute.xlu0 0
          %1341 = vperm.xlu0 %1340, %v1283
          %v1342 = vpop.permute.xlu0 %1341
          %1345 = vset.pattern.permute.xlu0 0
          %1346 = vperm.xlu0 %1345, %v1284
          %v1347 = vpop.permute.xlu0 %1346
          %1350 = vset.pattern.permute.xlu0 0
          %1351 = vperm.xlu0 %1350, %v1285
          %v1352 = vpop.permute.xlu0 %1351
          %1355 = vset.pattern.permute.xlu0 0
          %1356 = vperm.xlu0 %1355, %v1286
          %v1357 = vpop.permute.xlu0 %1356
          %1360 = vset.pattern.permute.xlu0 0
          %1361 = vperm.xlu0 %1360, %v1287
          %v1362 = vpop.permute.xlu0 %1361
          %1365 = vset.pattern.permute.xlu0 0
          %1366 = vperm.xlu0 %1365, %v1288
          %v1367 = vpop.permute.xlu0 %1366
          %1370 = vset.pattern.permute.xlu0 0
          %1371 = vperm.xlu0 %1370, %v1289
          %v1372 = vpop.permute.xlu0 %1371
          %1375 = vset.pattern.permute.xlu0 0
          %1376 = vperm.xlu0 %1375, %v1290
          %v1377 = vpop.permute.xlu0 %1376
          %1380 = vset.pattern.permute.xlu0 0
          %1381 = vperm.xlu0 %1380, %v1291
          %v1382 = vpop.permute.xlu0 %1381
          %1385 = vset.pattern.permute.xlu0 0
          %1386 = vperm.xlu0 %1385, %v1292
          %v1387 = vpop.permute.xlu0 %1386
          %v1389 = vmul.f32 %v1293, %v1312
          %v1390 = vmul.f32 %v1294, %v1317
          %v1391 = vmul.f32 %v1295, %v1322
          %v1392 = vmul.f32 %v1296, %v1327
          %v1393 = vmul.f32 %v1297, %v1332
          %v1394 = vmul.f32 %v1298, %v1337
          %v1395 = vmul.f32 %v1299, %v1342
          %v1396 = vmul.f32 %v1300, %v1347
          %v1397 = vmul.f32 %v1301, %v1352
          %v1398 = vmul.f32 %v1302, %v1357
          %v1399 = vmul.f32 %v1303, %v1362
          %v1400 = vmul.f32 %v1304, %v1367
          %v1401 = vmul.f32 %v1305, %v1372
          %v1402 = vmul.f32 %v1306, %v1377
          %v1403 = vmul.f32 %v1307, %v1382
          %v1404 = vmul.f32 %v1308, %v1387
          %1405 = vst.msk [vmem:[%s156] sm:$0xff] %vm1240, %v1389
          %1406 = vst.msk [vmem:[%s156 + $0x8] sm:$0xff] %vm1240, %v1390
          %1407 = vst.msk [vmem:[%s156 + $0x10] sm:$0xff] %vm1240, %v1391
          %1408 = vst.msk [vmem:[%s156 + $0x18] sm:$0xff] %vm1240, %v1392
          %1409 = vst.msk [vmem:[%s156 + $0x20] sm:$0xff] %vm1240, %v1393
          %1410 = vst.msk [vmem:[%s156 + $0x28] sm:$0xff] %vm1240, %v1394
          %1411 = vst.msk [vmem:[%s156 + $0x30] sm:$0xff] %vm1240, %v1395
          %1412 = vst.msk [vmem:[%s156 + $0x38] sm:$0xff] %vm1240, %v1396
          %1413 = vst.msk [vmem:[%s156 + $0x40] sm:$0xff] %vm1240, %v1397
          %1414 = vst.msk [vmem:[%s156 + $0x48] sm:$0xff] %vm1240, %v1398
          %1415 = vst.msk [vmem:[%s156 + $0x50] sm:$0xff] %vm1240, %v1399
          %1416 = vst.msk [vmem:[%s156 + $0x58] sm:$0xff] %vm1240, %v1400
          %1417 = vst.msk [vmem:[%s156 + $0x60] sm:$0xff] %vm1240, %v1401
          %1418 = vst.msk [vmem:[%s156 + $0x68] sm:$0xff] %vm1240, %v1402
          %1419 = vst.msk [vmem:[%s156 + $0x70] sm:$0xff] %vm1240, %v1403
          %1420 = vst.msk [vmem:[%s156 + $0x78] sm:$0xff] %vm1240, %v1404
        $region36: #{tpu_custom_call.1} parent=27 // pred_fallthru
          _
        %s1421 = sand.u32 %s85, 1
        %s1422 = scalar_lea.sflag [#allocation6], %s1421
        %s1423 = sand.u32 %s85, 1
        %s1424 = smul.addr %s1423, 128
        %s1425 = scalar_lea.vmem [#allocation5], %s1424
        // Predicated region
        $region37: #{tpu_custom_call.1} parent=27 // pred_check
          %p1426 = pneg %p95
        $region38: #{tpu_custom_call.1} parent=27 // pred_check_branch
          %1428 = sbr.rel (%p1426) target = $region40
        $region39: #{tpu_custom_call.1} parent=27 // pred_region
          %s1430 = ssub.s32 2048, 2048
          %1431 = vsyncadd %s1422, %s1430
          %s1432 = smul.addr %s20, 16
          %s1433 = smul.addr %s1432, 128
          %s1434 = scalar_lea.hbm %s2, %s1433
          %s1435 = sshll.u32 %s1425, 4
          %s1436 = int_to_ptr.vmem [resolvable:$true] %s1435
          %1441 = dma.vmem_to_hbm [thread:$0]  %s1436, 2048, %s1434, %s1422, 128, 128, 8
        $region40: #{tpu_custom_call.1} parent=27 // pred_fallthru
          _
      $region28: #{tpu_custom_call.1} parent=5 // pred_fallthru
        _
      %p1442 = scmp.le.s32.totalorder 2, %s11
      // Predicated region
      $region41: #{tpu_custom_call.1} parent=5 // pred_check
        %p1443 = pneg %p1442
      $region42: #{tpu_custom_call.1} parent=5 // pred_check_branch
        %1445 = sbr.rel (%p1443) target = $region44
      $region43: #{tpu_custom_call.1} parent=5 // pred_region
        %s1446 = ssub.s32 %s11, 2
        // Predicated region
        $region45: #{tpu_custom_call.1} parent=43 // pred_check
          %p1447 = pneg %p101
        $region46: #{tpu_custom_call.1} parent=43 // pred_check_branch
          %1449 = sbr.rel (%p1447) target = $region48
        $region47: #{tpu_custom_call.1} parent=43 // pred_region
          %s1450 = sand.u32 %s86, 1
          %s1451 = scalar_lea.sflag [#allocation6], %s1450
          %s1452 = sand.u32 %s86, 1
          %s1453 = smul.addr %s1452, 128
          %s1454 = scalar_lea.vmem [#allocation5], %s1453
          %1455 = dma.done %s1451, 2048
        $region48: #{tpu_custom_call.1} parent=43 // pred_fallthru
          _
      $region44: #{tpu_custom_call.1} parent=5 // pred_fallthru
        _
    $region6: #{tpu_custom_call.1} parent=1 // loop_footer
      %s15 = sadd.s32 1, %s11
    $region7: #{tpu_custom_call.1} parent=1 // loop_footer_branch
      %10 = sbr.rel target = $region3
    $region8: #{tpu_custom_call.1} parent=1 // loop_exit
      _
    %1456 = vsyncpa [#allocation6], 1
    %s1457 = scalar_lea.sflag [#allocation6], 1
    %1458 = vsyncpa %s1457, 1

</llo_original>
